<compile_context>
chip_gen: v7x
topology: tpu7x:2x2x1
jax: 0.10.0
libtpu: 0.0.40
codegen_flags: <defaults>
</compile_context>

<pallas_src>
import functools

import jax
import jax.numpy as jnp
from jax import lax
from jax.experimental import pallas as pl
from jax.experimental.pallas import tpu as pltpu


# Contract last dim of lhs with last dim of rhs (i.e. x @ W.T for nn.Linear weights).
_DN = (((1,), (1,)), ((), ()))


def _moe_lora_kernel(lora_alpha,
                     counts_ref,                       # SMEM (nT, E) i32 (scalar prefetch)
                     gw_ref, x_ref,                    # (tm, E) f32, (tm, D) bf16
                     w1_ref, w3_ref, w2_ref,           # (D, D) bf16 each (constant blocks)
                     a1_ref, b1_ref, a2_ref, b2_ref, a3_ref, b3_ref,
                     out_ref,                          # (tm, D) out dtype
                     base1_ref, base3_ref, acc_ref):   # (tm, D) f32 VMEM scratch
    t = pl.program_id(0)
    e = pl.program_id(1)

    # Expert-invariant base projections + accumulator init, once per token tile.
    @pl.when(e == 0)
    def _():
        x = x_ref[...]
        base1_ref[...] = lax.dot_general(x, w1_ref[...], _DN,
                                         preferred_element_type=jnp.float32)
        base3_ref[...] = lax.dot_general(x, w3_ref[...], _DN,
                                         preferred_element_type=jnp.float32)
        acc_ref[...] = jnp.zeros_like(acc_ref)

    # Skip experts with no routed tokens in this tile (gate weight is all-zero there).
    @pl.when(counts_ref[t, e] > 0)
    def _():
        x = x_ref[...]

        # Low-rank LoRA corrections for the gate/up projections (never build W + a*A@B).
        u1 = lax.dot_general(x, b1_ref[0], _DN, preferred_element_type=jnp.float32)
        l1 = lax.dot_general(u1.astype(jnp.bfloat16), a1_ref[0], _DN,
                             preferred_element_type=jnp.float32)
        u3 = lax.dot_general(x, b3_ref[0], _DN, preferred_element_type=jnp.float32)
        l3 = lax.dot_general(u3.astype(jnp.bfloat16), a3_ref[0], _DN,
                             preferred_element_type=jnp.float32)

        h = jax.nn.silu(base1_ref[...] + lora_alpha * l1) \
            * (base3_ref[...] + lora_alpha * l3)                       # (tm, D) f32

        # Per-token gate weight for this expert, selected from the lane-dense (tm, E) block
        # and folded into h before the down-projection (lane-dense broadcast).
        gw_all = gw_ref[...]
        lane = lax.broadcasted_iota(jnp.int32, gw_all.shape, 1)
        gw = jnp.sum(jnp.where(lane == e, gw_all, 0.0), axis=1, keepdims=True)  # (tm, 1)
        hg = (gw * h).astype(jnp.bfloat16)

        # Down projection:  h @ W2'^T = h@W2^T + a*(h@B2^T)@A2^T, fp32 accumulation.
        d0 = lax.dot_general(hg, w2_ref[...], _DN, preferred_element_type=jnp.float32)
        u2 = lax.dot_general(hg, b2_ref[0], _DN, preferred_element_type=jnp.float32)
        d1 = lax.dot_general(u2.astype(jnp.bfloat16), a2_ref[0], _DN,
                             preferred_element_type=jnp.float32)
        acc_ref[...] += d0 + lora_alpha * d1

    @pl.when(e == pl.num_programs(1) - 1)
    def _():
        out_ref[...] = acc_ref[...].astype(out_ref.dtype)


def _pick_token_tile(T, cap=256):
    """Largest divisor of T that is <= cap and a multiple of 8, else T (full dim)."""
    for cand in range(min(cap, T), 7, -1):
        if T % cand == 0 and cand % 8 == 0:
            return cand
    return T


def mistral_molora_forward(x, gate_w, w1, w2, w3,
                           A1, B1, A2, B2, A3, B3,
                           *, num_experts_per_tok, lora_alpha, block_t=256):
    T, D = x.shape
    E = gate_w.shape[0]
    R = A1.shape[-1]

    tm = _pick_token_tile(T, block_t)
    nT = T // tm

    # ---- routing glue (XLA): gate logits -> top-k -> softmax -> dense (T, E) weights ----
    gate_logits = x.astype(jnp.float32) @ gate_w.astype(jnp.float32).T          # (T, E)
    topk_vals, topk_idx = lax.top_k(gate_logits, num_experts_per_tok)           # (T, k)
    topk_w = jax.nn.softmax(topk_vals, axis=1)                                  # (T, k) f32
    one_hot = (topk_idx[:, :, None] == jnp.arange(E)[None, None, :]).astype(jnp.float32)
    dense_w = jnp.einsum('tk,tke->te', topk_w, one_hot)                         # (T, E) f32
    # Per-(token tile, expert) routed counts -> lets the kernel skip empty experts.
    counts = (dense_w > 0.0).reshape(nT, tm, E).sum(axis=1).astype(jnp.int32)   # (nT, E)

    # bf16 MXU operands; accumulation stays fp32 inside the kernel.
    bf16 = lambda a: a.astype(jnp.bfloat16)
    xb = bf16(x)
    w1b, w2b, w3b = bf16(w1), bf16(w2), bf16(w3)
    a1b, b1b, a2b, b2b, a3b, b3b = map(bf16, (A1, B1, A2, B2, A3, B3))

    flops = (2 * 2 * T * D * D                # shared x@W1^T, x@W3^T (once per tile)
             + E * 2 * T * D * D              # per-expert down projection (upper bound)
             + E * 6 * 2 * T * D * R)         # six skinny LoRA GEMMs per expert
    bytes_accessed = (T * D * 2 + 3 * D * D * 2 + 6 * E * D * R * 2
                      + T * E * 4 + nT * E * 4 + T * D * x.dtype.itemsize)
    cost = pl.CostEstimate(flops=flops, transcendentals=E * T * D,
                           bytes_accessed=bytes_accessed)

    kernel = functools.partial(_moe_lora_kernel, float(lora_alpha))
    out = pl.pallas_call(
        kernel,
        out_shape=jax.ShapeDtypeStruct((T, D), x.dtype),
        grid_spec=pltpu.PrefetchScalarGridSpec(
            num_scalar_prefetch=1,
            grid=(nT, E),                       # token tiles (parallel) x experts (reduction)
            in_specs=[
                pl.BlockSpec((tm, E),  lambda t, e, cnt: (t, 0)),       # dense gate weights
                pl.BlockSpec((tm, D),  lambda t, e, cnt: (t, 0)),       # x
                pl.BlockSpec((D, D),   lambda t, e, cnt: (0, 0)),       # W1 (shared)
                pl.BlockSpec((D, D),   lambda t, e, cnt: (0, 0)),       # W3 (shared)
                pl.BlockSpec((D, D),   lambda t, e, cnt: (0, 0)),       # W2 (shared)
                pl.BlockSpec((1, D, R), lambda t, e, cnt: (e, 0, 0)),   # A1
                pl.BlockSpec((1, R, D), lambda t, e, cnt: (e, 0, 0)),   # B1
                pl.BlockSpec((1, D, R), lambda t, e, cnt: (e, 0, 0)),   # A2
                pl.BlockSpec((1, R, D), lambda t, e, cnt: (e, 0, 0)),   # B2
                pl.BlockSpec((1, D, R), lambda t, e, cnt: (e, 0, 0)),   # A3
                pl.BlockSpec((1, R, D), lambda t, e, cnt: (e, 0, 0)),   # B3
            ],
            out_specs=pl.BlockSpec((tm, D), lambda t, e, cnt: (t, 0)),
            scratch_shapes=[pltpu.VMEM((tm, D), jnp.float32),   # base1 = x@W1^T
                            pltpu.VMEM((tm, D), jnp.float32),   # base3 = x@W3^T
                            pltpu.VMEM((tm, D), jnp.float32)],  # fp32 output accumulator
        ),
        compiler_params=pltpu.CompilerParams(
            dimension_semantics=("parallel", "arbitrary"),
            vmem_limit_bytes=64 * 1024 * 1024),
        cost_estimate=cost,
    )(counts, dense_w, xb, w1b, w3b, w2b, a1b, b1b, a2b, b2b, a3b, b3b)
    return out


def reference_forward(x, gate_w, w1, w2, w3, A1, B1, A2, B2, A3, B3,
                      *, num_experts_per_tok, lora_alpha):
    """Pure-JAX fp32 mirror of the PyTorch per-expert gather/scatter loop (the spec)."""
    E = gate_w.shape[0]
    gate_logits = x @ gate_w.T
    topk_vals, topk_idx = lax.top_k(gate_logits, num_experts_per_tok)
    weights = jax.nn.softmax(topk_vals.astype(jnp.float32), axis=1).astype(x.dtype)
    results = jnp.zeros_like(x)
    for e in range(E):
        w1p = w1 + lora_alpha * A1[e] @ B1[e]
        w2p = w2 + lora_alpha * A2[e] @ B2[e]
        w3p = w3 + lora_alpha * A3[e] @ B3[e]
        h = jax.nn.silu(x @ w1p.T) * (x @ w3p.T)
        out_e = h @ w2p.T
        w_e = jnp.sum(jnp.where(topk_idx == e, weights, 0.0), axis=1, keepdims=True)
        results = results + w_e * out_e
    return results


if __name__ == "__main__":
    # Lane-dense small test shapes: D (== hidden) multiple of 128, T multiple of 16.
    T, D, E, K, R = 16, 128, 4, 2, 16
    LORA_ALPHA = 0.5

    key = jax.random.PRNGKey(0)
    ks = jax.random.split(key, 12)
    x      = jax.random.normal(ks[0], (T, D), jnp.float32)
    gate_w = jax.random.normal(ks[1], (E, D), jnp.float32) * 0.1
    w1     = jax.random.normal(ks[2], (D, D), jnp.float32) * 0.05
    w2     = jax.random.normal(ks[3], (D, D), jnp.float32) * 0.05
    w3     = jax.random.normal(ks[4], (D, D), jnp.float32) * 0.05
    # Reference init is kaiming_uniform for A* and zeros for B*; B* get random values here
    # so the LoRA path is actually exercised (forward semantics unchanged).
    A1 = jax.random.uniform(ks[5],  (E, D, R), jnp.float32, -0.1, 0.1)
    B1 = jax.random.normal(ks[6],  (E, R, D), jnp.float32) * 0.15
    A2 = jax.random.uniform(ks[7],  (E, D, R), jnp.float32, -0.1, 0.1)
    B2 = jax.random.normal(ks[8],  (E, R, D), jnp.float32) * 0.15
    A3 = jax.random.uniform(ks[9],  (E, D, R), jnp.float32, -0.1, 0.1)
    B3 = jax.random.normal(ks[10], (E, R, D), jnp.float32) * 0.15

    out = mistral_molora_forward(
        x, gate_w, w1, w2, w3, A1, B1, A2, B2, A3, B3,
        num_experts_per_tok=K, lora_alpha=LORA_ALPHA)
    out = jax.block_until_ready(out)

    ref = reference_forward(
        x, gate_w, w1, w2, w3, A1, B1, A2, B2, A3, B3,
        num_experts_per_tok=K, lora_alpha=LORA_ALPHA)

    assert out.shape == x.shape and out.dtype == x.dtype
    # Kernel uses bf16 MXU operands with fp32 accumulation -> small rounding vs fp32 ref.
    max_err = float(jnp.max(jnp.abs(out - ref)))
    assert jnp.allclose(out, ref, rtol=2e-2, atol=2e-2), \
        f"kernel mismatch vs reference: max abs err {max_err}"
    print("KERNEL_OK")
</pallas_src>

<mosaic_0001>
module attributes {stable_mosaic.version = 11 : i64} {
  func.func @_moe_lora_kernel(%arg0: i32, %arg1: i32, %arg2: memref<1x4xi32, #tpu.memory_space<smem>>, %arg3: memref<16x4xf32, #tpu.memory_space<vmem>>, %arg4: memref<16x128xbf16, #tpu.memory_space<vmem>>, %arg5: memref<128x128xbf16, #tpu.memory_space<vmem>>, %arg6: memref<128x128xbf16, #tpu.memory_space<vmem>>, %arg7: memref<128x128xbf16, #tpu.memory_space<vmem>>, %arg8: memref<1x128x16xbf16, #tpu.memory_space<vmem>>, %arg9: memref<1x16x128xbf16, #tpu.memory_space<vmem>>, %arg10: memref<1x128x16xbf16, #tpu.memory_space<vmem>>, %arg11: memref<1x16x128xbf16, #tpu.memory_space<vmem>>, %arg12: memref<1x128x16xbf16, #tpu.memory_space<vmem>>, %arg13: memref<1x16x128xbf16, #tpu.memory_space<vmem>>, %arg14: memref<16x128xf32, #tpu.memory_space<vmem>>, %arg15: memref<16x128xf32, #tpu.memory_space<vmem>>, %arg16: memref<16x128xf32, #tpu.memory_space<vmem>>, %arg17: memref<16x128xf32, #tpu.memory_space<vmem>>) attributes {dimension_semantics = [#tpu.dimension_semantics<parallel>, #tpu.dimension_semantics<arbitrary>], iteration_bounds = array<i64: 1, 4>, scalar_prefetch = 1 : i64, scratch_operands = 3 : i64, tpu.core_type = #tpu.core_type<tc>, window_params = [{transform_indices = @transform_0, window_bounds = array<i64: 16, 4>}, {transform_indices = @transform_1, window_bounds = array<i64: 16, 128>}, {pipeline_mode = #tpu.pipeline_mode<synchronous>, transform_indices = @transform_2, window_bounds = array<i64: 128, 128>}, {pipeline_mode = #tpu.pipeline_mode<synchronous>, transform_indices = @transform_3, window_bounds = array<i64: 128, 128>}, {pipeline_mode = #tpu.pipeline_mode<synchronous>, transform_indices = @transform_4, window_bounds = array<i64: 128, 128>}, {transform_indices = @transform_5, window_bounds = array<i64: 1, 128, 16>}, {transform_indices = @transform_6, window_bounds = array<i64: 1, 16, 128>}, {transform_indices = @transform_7, window_bounds = array<i64: 1, 128, 16>}, {transform_indices = @transform_8, window_bounds = array<i64: 1, 16, 128>}, {transform_indices = @transform_9, window_bounds = array<i64: 1, 128, 16>}, {transform_indices = @transform_10, window_bounds = array<i64: 1, 16, 128>}, {transform_indices = @transform_11, window_bounds = array<i64: 16, 128>}]} {
    %c0_i32 = arith.constant 0 : i32
    %0 = arith.cmpi eq, %arg1, %c0_i32 : i32
    %1 = arith.extui %0 : i1 to i32
    %c0_i32_0 = arith.constant 0 : i32
    %2 = arith.cmpi ne, %1, %c0_i32_0 : i32
    scf.if %2 {
      %c0 = arith.constant 0 : index
      %c0_4 = arith.constant 0 : index
      %12 = vector.load %arg4[%c0, %c0_4] : memref<16x128xbf16, #tpu.memory_space<vmem>>, vector<16x128xbf16>
      %c0_5 = arith.constant 0 : index
      %c0_6 = arith.constant 0 : index
      %13 = vector.load %arg5[%c0_5, %c0_6] : memref<128x128xbf16, #tpu.memory_space<vmem>>, vector<128x128xbf16>
      %cst = arith.constant dense<0.000000e+00> : vector<16x128xf32>
      %14 = tpu.matmul %12, %13, %cst {dimension_numbers = #tpu.dot_dimension_numbers<[1], [1], [0], [0], [0, 0, 1, 0], [], []>} : vector<16x128xbf16>, vector<128x128xbf16>, vector<16x128xf32> -> vector<16x128xf32>
      %c0_7 = arith.constant 0 : index
      %c0_8 = arith.constant 0 : index
      %15 = vector.load %arg15[%c0_7, %c0_8] : memref<16x128xf32, #tpu.memory_space<vmem>>, vector<16x128xf32>
      tpu.vector_store %arg15[%c0_7, %c0_8], %14 {strides = array<i32>} : memref<16x128xf32, #tpu.memory_space<vmem>>, vector<16x128xf32>,
      %c0_9 = arith.constant 0 : index
      %c0_10 = arith.constant 0 : index
      %16 = vector.load %arg6[%c0_9, %c0_10] : memref<128x128xbf16, #tpu.memory_space<vmem>>, vector<128x128xbf16>
      %cst_11 = arith.constant dense<0.000000e+00> : vector<16x128xf32>
      %17 = tpu.matmul %12, %16, %cst_11 {dimension_numbers = #tpu.dot_dimension_numbers<[1], [1], [0], [0], [0, 0, 1, 0], [], []>} : vector<16x128xbf16>, vector<128x128xbf16>, vector<16x128xf32> -> vector<16x128xf32>
      %c0_12 = arith.constant 0 : index
      %c0_13 = arith.constant 0 : index
      %18 = vector.load %arg16[%c0_12, %c0_13] : memref<16x128xf32, #tpu.memory_space<vmem>>, vector<16x128xf32>
      tpu.vector_store %arg16[%c0_12, %c0_13], %17 {strides = array<i32>} : memref<16x128xf32, #tpu.memory_space<vmem>>, vector<16x128xf32>,
      %cst_14 = arith.constant 0.000000e+00 : f32
      %19 = vector.broadcast %cst_14 : f32 to vector<16x128xf32>
      %c0_15 = arith.constant 0 : index
      %c0_16 = arith.constant 0 : index
      %20 = vector.load %arg17[%c0_15, %c0_16] : memref<16x128xf32, #tpu.memory_space<vmem>>, vector<16x128xf32>
      tpu.vector_store %arg17[%c0_15, %c0_16], %19 {strides = array<i32>} : memref<16x128xf32, #tpu.memory_space<vmem>>, vector<16x128xf32>,
    } else {
    }
    %3 = arith.index_cast %arg0 : i32 to index
    %4 = arith.index_cast %arg1 : i32 to index
    %5 = memref.load %arg2[%3, %4] : memref<1x4xi32, #tpu.memory_space<smem>>
    %c0_i32_1 = arith.constant 0 : i32
    %6 = arith.cmpi sgt, %5, %c0_i32_1 : i32
    %7 = arith.extui %6 : i1 to i32
    %c0_i32_2 = arith.constant 0 : i32
    %8 = arith.cmpi ne, %7, %c0_i32_2 : i32
    scf.if %8 {
      %c0 = arith.constant 0 : index
      %c0_4 = arith.constant 0 : index
      %12 = vector.load %arg4[%c0, %c0_4] : memref<16x128xbf16, #tpu.memory_space<vmem>>, vector<16x128xbf16>
      %c0_5 = arith.constant 0 : index
      %c0_6 = arith.constant 0 : index
      %c0_7 = arith.constant 0 : index
      %13 = vector.load %arg9[%c0_5, %c0_6, %c0_7] : memref<1x16x128xbf16, #tpu.memory_space<vmem>>, vector<1x16x128xbf16>
      %14 = vector.shape_cast %13 : vector<1x16x128xbf16> to vector<16x128xbf16>
      %cst = arith.constant dense<0.000000e+00> : vector<16x16xf32>
      %15 = tpu.matmul %12, %14, %cst {dimension_numbers = #tpu.dot_dimension_numbers<[1], [1], [0], [0], [0, 0, 1, 0], [], []>} : vector<16x128xbf16>, vector<16x128xbf16>, vector<16x16xf32> -> vector<16x16xf32>
      %16 = arith.truncf %15 : vector<16x16xf32> to vector<16x16xbf16>
      %c0_8 = arith.constant 0 : index
      %c0_9 = arith.constant 0 : index
      %c0_10 = arith.constant 0 : index
      %17 = vector.load %arg8[%c0_8, %c0_9, %c0_10] : memref<1x128x16xbf16, #tpu.memory_space<vmem>>, vector<1x128x16xbf16>
      %18 = vector.shape_cast %17 : vector<1x128x16xbf16> to vector<128x16xbf16>
      %cst_11 = arith.constant dense<0.000000e+00> : vector<16x128xf32>
      %19 = tpu.matmul %16, %18, %cst_11 {dimension_numbers = #tpu.dot_dimension_numbers<[1], [1], [0], [0], [0, 0, 1, 0], [], []>} : vector<16x16xbf16>, vector<128x16xbf16>, vector<16x128xf32> -> vector<16x128xf32>
      %c0_12 = arith.constant 0 : index
      %c0_13 = arith.constant 0 : index
      %c0_14 = arith.constant 0 : index
      %20 = vector.load %arg13[%c0_12, %c0_13, %c0_14] : memref<1x16x128xbf16, #tpu.memory_space<vmem>>, vector<1x16x128xbf16>
      %21 = vector.shape_cast %20 : vector<1x16x128xbf16> to vector<16x128xbf16>
      %cst_15 = arith.constant dense<0.000000e+00> : vector<16x16xf32>
      %22 = tpu.matmul %12, %21, %cst_15 {dimension_numbers = #tpu.dot_dimension_numbers<[1], [1], [0], [0], [0, 0, 1, 0], [], []>} : vector<16x128xbf16>, vector<16x128xbf16>, vector<16x16xf32> -> vector<16x16xf32>
      %23 = arith.truncf %22 : vector<16x16xf32> to vector<16x16xbf16>
      %c0_16 = arith.constant 0 : index
      %c0_17 = arith.constant 0 : index
      %c0_18 = arith.constant 0 : index
      %24 = vector.load %arg12[%c0_16, %c0_17, %c0_18] : memref<1x128x16xbf16, #tpu.memory_space<vmem>>, vector<1x128x16xbf16>
      %25 = vector.shape_cast %24 : vector<1x128x16xbf16> to vector<128x16xbf16>
      %cst_19 = arith.constant dense<0.000000e+00> : vector<16x128xf32>
      %26 = tpu.matmul %23, %25, %cst_19 {dimension_numbers = #tpu.dot_dimension_numbers<[1], [1], [0], [0], [0, 0, 1, 0], [], []>} : vector<16x16xbf16>, vector<128x16xbf16>, vector<16x128xf32> -> vector<16x128xf32>
      %c0_20 = arith.constant 0 : index
      %c0_21 = arith.constant 0 : index
      %27 = vector.load %arg15[%c0_20, %c0_21] : memref<16x128xf32, #tpu.memory_space<vmem>>, vector<16x128xf32>
      %cst_22 = arith.constant 5.000000e-01 : f32
      %28 = vector.broadcast %cst_22 : f32 to vector<16x128xf32>
      %29 = arith.mulf %28, %19 : vector<16x128xf32>
      %30 = arith.addf %27, %29 : vector<16x128xf32>
      %31 = arith.negf %30 : vector<16x128xf32>
      %32 = math.exp %31 : vector<16x128xf32>
      %cst_23 = arith.constant 1.000000e+00 : f32
      %33 = vector.broadcast %cst_23 : f32 to vector<16x128xf32>
      %34 = arith.addf %33, %32 : vector<16x128xf32>
      %35 = arith.divf %33, %34 : vector<16x128xf32>
      %36 = arith.mulf %30, %35 : vector<16x128xf32>
      %c0_24 = arith.constant 0 : index
      %c0_25 = arith.constant 0 : index
      %37 = vector.load %arg16[%c0_24, %c0_25] : memref<16x128xf32, #tpu.memory_space<vmem>>, vector<16x128xf32>
      %cst_26 = arith.constant 5.000000e-01 : f32
      %38 = vector.broadcast %cst_26 : f32 to vector<16x128xf32>
      %39 = arith.mulf %38, %26 : vector<16x128xf32>
      %40 = arith.addf %37, %39 : vector<16x128xf32>
      %41 = arith.mulf %36, %40 : vector<16x128xf32>
      %c0_27 = arith.constant 0 : index
      %c0_28 = arith.constant 0 : index
      %42 = vector.load %arg3[%c0_27, %c0_28] : memref<16x4xf32, #tpu.memory_space<vmem>>, vector<16x4xf32>
      %43 = tpu.iota {dimensions = array<i32: 1>} : vector<16x4xi32>
      %44 = vector.broadcast %arg1 : i32 to vector<16x4xi32>
      %45 = arith.cmpi eq, %43, %44 : vector<16x4xi32>
      %cst_29 = arith.constant 0.000000e+00 : f32
      %46 = vector.broadcast %cst_29 : f32 to vector<16x4xf32>
      %47 = arith.select %45, %42, %46 : vector<16x4xi1>, vector<16x4xf32>
      %cst_30 = arith.constant dense<0.000000e+00> : vector<16xf32>
      %48 = vector.multi_reduction <add>, %47, %cst_30 [1] : vector<16x4xf32> to vector<16xf32>
      %49 = vector.shape_cast %48 : vector<16xf32> to vector<16x1xf32>
      %50 = vector.broadcast %49 : vector<16x1xf32> to vector<16x128xf32>
      %51 = arith.mulf %50, %41 : vector<16x128xf32>
      %52 = arith.truncf %51 : vector<16x128xf32> to vector<16x128xbf16>
      %c0_31 = arith.constant 0 : index
      %c0_32 = arith.constant 0 : index
      %53 = vector.load %arg7[%c0_31, %c0_32] : memref<128x128xbf16, #tpu.memory_space<vmem>>, vector<128x128xbf16>
      %cst_33 = arith.constant dense<0.000000e+00> : vector<16x128xf32>
      %54 = tpu.matmul %52, %53, %cst_33 {dimension_numbers = #tpu.dot_dimension_numbers<[1], [1], [0], [0], [0, 0, 1, 0], [], []>} : vector<16x128xbf16>, vector<128x128xbf16>, vector<16x128xf32> -> vector<16x128xf32>
      %c0_34 = arith.constant 0 : index
      %c0_35 = arith.constant 0 : index
      %c0_36 = arith.constant 0 : index
      %55 = vector.load %arg11[%c0_34, %c0_35, %c0_36] : memref<1x16x128xbf16, #tpu.memory_space<vmem>>, vector<1x16x128xbf16>
      %56 = vector.shape_cast %55 : vector<1x16x128xbf16> to vector<16x128xbf16>
      %cst_37 = arith.constant dense<0.000000e+00> : vector<16x16xf32>
      %57 = tpu.matmul %52, %56, %cst_37 {dimension_numbers = #tpu.dot_dimension_numbers<[1], [1], [0], [0], [0, 0, 1, 0], [], []>} : vector<16x128xbf16>, vector<16x128xbf16>, vector<16x16xf32> -> vector<16x16xf32>
      %58 = arith.truncf %57 : vector<16x16xf32> to vector<16x16xbf16>
      %c0_38 = arith.constant 0 : index
      %c0_39 = arith.constant 0 : index
      %c0_40 = arith.constant 0 : index
      %59 = vector.load %arg10[%c0_38, %c0_39, %c0_40] : memref<1x128x16xbf16, #tpu.memory_space<vmem>>, vector<1x128x16xbf16>
      %60 = vector.shape_cast %59 : vector<1x128x16xbf16> to vector<128x16xbf16>
      %cst_41 = arith.constant dense<0.000000e+00> : vector<16x128xf32>
      %61 = tpu.matmul %58, %60, %cst_41 {dimension_numbers = #tpu.dot_dimension_numbers<[1], [1], [0], [0], [0, 0, 1, 0], [], []>} : vector<16x16xbf16>, vector<128x16xbf16>, vector<16x128xf32> -> vector<16x128xf32>
      %c0_42 = arith.constant 0 : index
      %c0_43 = arith.constant 0 : index
      %62 = vector.load %arg17[%c0_42, %c0_43] : memref<16x128xf32, #tpu.memory_space<vmem>>, vector<16x128xf32>
      %cst_44 = arith.constant 5.000000e-01 : f32
      %63 = vector.broadcast %cst_44 : f32 to vector<16x128xf32>
      %64 = arith.mulf %63, %61 : vector<16x128xf32>
      %65 = arith.addf %54, %64 : vector<16x128xf32>
      %66 = arith.addf %62, %65 : vector<16x128xf32>
      %c0_45 = arith.constant 0 : index
      %c0_46 = arith.constant 0 : index
      %67 = vector.load %arg17[%c0_45, %c0_46] : memref<16x128xf32, #tpu.memory_space<vmem>>, vector<16x128xf32>
      tpu.vector_store %arg17[%c0_45, %c0_46], %66 {strides = array<i32>} : memref<16x128xf32, #tpu.memory_space<vmem>>, vector<16x128xf32>,
    } else {
    }
    %c3_i32 = arith.constant 3 : i32
    %9 = arith.cmpi eq, %arg1, %c3_i32 : i32
    %10 = arith.extui %9 : i1 to i32
    %c0_i32_3 = arith.constant 0 : i32
    %11 = arith.cmpi ne, %10, %c0_i32_3 : i32
    scf.if %11 {
      %c0 = arith.constant 0 : index
      %c0_4 = arith.constant 0 : index
      %12 = vector.load %arg17[%c0, %c0_4] : memref<16x128xf32, #tpu.memory_space<vmem>>, vector<16x128xf32>
      %c0_5 = arith.constant 0 : index
      %c0_6 = arith.constant 0 : index
      %13 = vector.load %arg14[%c0_5, %c0_6] : memref<16x128xf32, #tpu.memory_space<vmem>>, vector<16x128xf32>
      tpu.vector_store %arg14[%c0_5, %c0_6], %12 {strides = array<i32>} : memref<16x128xf32, #tpu.memory_space<vmem>>, vector<16x128xf32>,
    } else {
    }
    return
  }
  func.func @transform_0(%arg0: i32, %arg1: i32, %arg2: memref<1x4xi32, #tpu.memory_space<smem>>) -> (i32, i32) {
    %c0_i32 = arith.constant 0 : i32
    %c0_i32_0 = arith.constant 0 : i32
    return %arg0, %c0_i32 : i32, i32
  }
  func.func @transform_1(%arg0: i32, %arg1: i32, %arg2: memref<1x4xi32, #tpu.memory_space<smem>>) -> (i32, i32) {
    %c0_i32 = arith.constant 0 : i32
    %c0_i32_0 = arith.constant 0 : i32
    return %arg0, %c0_i32 : i32, i32
  }
  func.func @transform_2(%arg0: i32, %arg1: i32, %arg2: memref<1x4xi32, #tpu.memory_space<smem>>) -> (i32, i32) {
    %c0_i32 = arith.constant 0 : i32
    %c0_i32_0 = arith.constant 0 : i32
    %c0_i32_1 = arith.constant 0 : i32
    return %c0_i32, %c0_i32_0 : i32, i32
  }
  func.func @transform_3(%arg0: i32, %arg1: i32, %arg2: memref<1x4xi32, #tpu.memory_space<smem>>) -> (i32, i32) {
    %c0_i32 = arith.constant 0 : i32
    %c0_i32_0 = arith.constant 0 : i32
    %c0_i32_1 = arith.constant 0 : i32
    return %c0_i32, %c0_i32_0 : i32, i32
  }
  func.func @transform_4(%arg0: i32, %arg1: i32, %arg2: memref<1x4xi32, #tpu.memory_space<smem>>) -> (i32, i32) {
    %c0_i32 = arith.constant 0 : i32
    %c0_i32_0 = arith.constant 0 : i32
    %c0_i32_1 = arith.constant 0 : i32
    return %c0_i32, %c0_i32_0 : i32, i32
  }
  func.func @transform_5(%arg0: i32, %arg1: i32, %arg2: memref<1x4xi32, #tpu.memory_space<smem>>) -> (i32, i32, i32) {
    %c0_i32 = arith.constant 0 : i32
    %c0_i32_0 = arith.constant 0 : i32
    %c0_i32_1 = arith.constant 0 : i32
    return %arg1, %c0_i32, %c0_i32_0 : i32, i32, i32
  }
  func.func @transform_6(%arg0: i32, %arg1: i32, %arg2: memref<1x4xi32, #tpu.memory_space<smem>>) -> (i32, i32, i32) {
    %c0_i32 = arith.constant 0 : i32
    %c0_i32_0 = arith.constant 0 : i32
    %c0_i32_1 = arith.constant 0 : i32
    return %arg1, %c0_i32, %c0_i32_0 : i32, i32, i32
  }
  func.func @transform_7(%arg0: i32, %arg1: i32, %arg2: memref<1x4xi32, #tpu.memory_space<smem>>) -> (i32, i32, i32) {
    %c0_i32 = arith.constant 0 : i32
    %c0_i32_0 = arith.constant 0 : i32
    %c0_i32_1 = arith.constant 0 : i32
    return %arg1, %c0_i32, %c0_i32_0 : i32, i32, i32
  }
  func.func @transform_8(%arg0: i32, %arg1: i32, %arg2: memref<1x4xi32, #tpu.memory_space<smem>>) -> (i32, i32, i32) {
    %c0_i32 = arith.constant 0 : i32
    %c0_i32_0 = arith.constant 0 : i32
    %c0_i32_1 = arith.constant 0 : i32
    return %arg1, %c0_i32, %c0_i32_0 : i32, i32, i32
  }
  func.func @transform_9(%arg0: i32, %arg1: i32, %arg2: memref<1x4xi32, #tpu.memory_space<smem>>) -> (i32, i32, i32) {
    %c0_i32 = arith.constant 0 : i32
    %c0_i32_0 = arith.constant 0 : i32
    %c0_i32_1 = arith.constant 0 : i32
    return %arg1, %c0_i32, %c0_i32_0 : i32, i32, i32
  }
  func.func @transform_10(%arg0: i32, %arg1: i32, %arg2: memref<1x4xi32, #tpu.memory_space<smem>>) -> (i32, i32, i32) {
    %c0_i32 = arith.constant 0 : i32
    %c0_i32_0 = arith.constant 0 : i32
    %c0_i32_1 = arith.constant 0 : i32
    return %arg1, %c0_i32, %c0_i32_0 : i32, i32, i32
  }
  func.func @transform_11(%arg0: i32, %arg1: i32, %arg2: memref<1x4xi32, #tpu.memory_space<smem>>) -> (i32, i32) {
    %c0_i32 = arith.constant 0 : i32
    %c0_i32_0 = arith.constant 0 : i32
    return %arg0, %c0_i32 : i32, i32
  }
}

</mosaic_0001>

<llo_original>
// kernel: tpu_custom_call.1
$region0: #{tpu_custom_call.1}
  #allocation0 [shape = 'u32[]', space=smem, size = 0x4, offset = 0x4, fixed_abs, tag = 'smem constant byte address 0x4 - core index']
  #allocation1 [shape = 'u32[144,128]{1,0:T(1,128)}', space=vmem, size = 0x12000, scoped, tag = 'internal scratch']
  #allocation2 [shape = 'f32[16,128]{1,0:T(8,128)}', space=vmem, size = 0x2000, scoped, tag = 'scratch operand']
  #allocation3 [shape = 'f32[16,128]{1,0:T(8,128)}', space=vmem, size = 0x2000, scoped, tag = 'scratch operand']
  #allocation4 [shape = 'f32[16,128]{1,0:T(8,128)}', space=vmem, size = 0x2000, scoped, tag = 'scratch operand']
  #allocation5 [shape = 's32[1]{0}', space=sflag, size = 0x4, scoped, tag = 'scoped memory for tpu_custom_call.1']
  #allocation6 [shape = 'u8[512]{0}', space=smem, size = 0x200, scoped, tag = 'prefetched SMEM operand 0']
  %s0 = inlined_call_operand.hbm [shape: s32[1,4], index: 0, kind: input, shape index: {}]
  %s1 = inlined_call_operand.hbm [shape: f32[16,4], index: 1, kind: input, shape index: {}]
  %s2 = inlined_call_operand.hbm [shape: bf16[16,128], index: 2, kind: input, shape index: {}]
  %s3 = inlined_call_operand.hbm [shape: bf16[128,128], index: 3, kind: input, shape index: {}]
  %s4 = inlined_call_operand.hbm [shape: bf16[128,128], index: 4, kind: input, shape index: {}]
  %s5 = inlined_call_operand.hbm [shape: bf16[128,128], index: 5, kind: input, shape index: {}]
  %s6 = inlined_call_operand.hbm [shape: bf16[4,128,16], index: 6, kind: input, shape index: {}]
  %s7 = inlined_call_operand.hbm [shape: bf16[4,16,128], index: 7, kind: input, shape index: {}]
  %s8 = inlined_call_operand.hbm [shape: bf16[4,128,16], index: 8, kind: input, shape index: {}]
  %s9 = inlined_call_operand.hbm [shape: bf16[4,16,128], index: 9, kind: input, shape index: {}]
  %s10 = inlined_call_operand.hbm [shape: bf16[4,128,16], index: 10, kind: input, shape index: {}]
  %s11 = inlined_call_operand.hbm [shape: bf16[4,16,128], index: 11, kind: input, shape index: {}]
  %s12 = inlined_call_operand.hbm [shape: f32[16,128], index: 12, kind: output, shape index: {}]
  %s13 = sld [smem:[#allocation0]]
  $region133: #{tpu_custom_call.1} parent=0
    _
  %s15 = ssub.s32 1, %s13
  %s16 = scalar_select 0, %s15, %s13
  %18 = dma.hbm_to_smem %s0, 16, [#allocation6], [#allocation5]
  %19 = dma.done [#allocation5], 16
  %20 = sfence
  $region1: #{tpu_custom_call.1} parent=0
    #allocation7 [shape = 'u8[8192]{0}', space=vmem, size = 0x2000, scoped, tag = 'input window, operand 1, single buffered']
    #allocation8 [shape = 's32[2]{0}', space=sflag, size = 0x8, scoped, tag = 'scoped memory for tpu_custom_call.1']
    #allocation9 [shape = 's32[2]{0}', space=sflag, size = 0x8, scoped, tag = 'scoped memory for tpu_custom_call.1']
    #allocation10 [shape = 'u8[4096]{0}', space=vmem, size = 0x1000, scoped, tag = 'input window, operand 2, single buffered']
    #allocation11 [shape = 's32[1]{0}', space=sflag, size = 0x4, scoped, tag = 'scoped memory for tpu_custom_call.1']
    #allocation12 [shape = 'u8[32768]{0}', space=vmem, size = 0x8000, scoped, tag = 'input window, operand 3, single buffered']
    #allocation13 [shape = 'u8[32768]{0}', space=vmem, size = 0x8000, scoped, tag = 'input window, operand 4, single buffered']
    #allocation14 [shape = 's32[1]{0}', space=sflag, size = 0x4, scoped, tag = 'scoped memory for tpu_custom_call.1']
    #allocation15 [shape = 'u8[32768]{0}', space=vmem, size = 0x8000, scoped, tag = 'input window, operand 5, single buffered']
    #allocation16 [shape = 'u8[65536]{0}', space=vmem, size = 0x10000, scoped, tag = 'input window, operand 6']
    #allocation17 [shape = 's32[2]{0}', space=sflag, size = 0x8, scoped, tag = 'scoped memory for tpu_custom_call.1']
    #allocation18 [shape = 'u8[8192]{0}', space=vmem, size = 0x2000, scoped, tag = 'input window, operand 7']
    #allocation19 [shape = 'u8[65536]{0}', space=vmem, size = 0x10000, scoped, tag = 'input window, operand 8']
    #allocation20 [shape = 's32[2]{0}', space=sflag, size = 0x8, scoped, tag = 'scoped memory for tpu_custom_call.1']
    #allocation21 [shape = 'u8[8192]{0}', space=vmem, size = 0x2000, scoped, tag = 'input window, operand 9']
    #allocation22 [shape = 'u8[65536]{0}', space=vmem, size = 0x10000, scoped, tag = 'input window, operand 10']
    #allocation23 [shape = 's32[2]{0}', space=sflag, size = 0x8, scoped, tag = 'scoped memory for tpu_custom_call.1']
    #allocation24 [shape = 'u8[8192]{0}', space=vmem, size = 0x2000, scoped, tag = 'input window, operand 11']
    #allocation25 [shape = 'u8[8192]{0}', space=vmem, size = 0x2000, scoped, tag = 'output window, operand 0, single buffered']
    %21 = vsyncpa [#allocation8], 0
    %22 = vsyncpa [#allocation11], 0
    %23 = vsyncpa [#allocation14], 0
    %24 = vsyncpa [#allocation17], 0
    %s25 = scalar_lea.sflag [#allocation17], 1
    %26 = vsyncpa %s25, 0
    %27 = vsyncpa [#allocation20], 0
    %s28 = scalar_lea.sflag [#allocation20], 1
    %29 = vsyncpa %s28, 0
    %30 = vsyncpa [#allocation23], 0
    %s31 = scalar_lea.sflag [#allocation23], 1
    %32 = vsyncpa %s31, 0
    %33 = vsyncpa [#allocation9], 0
    loop: start=0, step=1, limit=6
    $region2: #{tpu_custom_call.1} parent=1 // loop_pre_header
      _
    $region3: #{tpu_custom_call.1} parent=1 // loop_header
      %s35 = sphi 0, %s39
      %p36 = scmp.ge.s32.totalorder %s35, 6
      %s42 = sphi 0, %s54
      %s43 = sphi 0, %s50
      %s44 = sphi 0, %s42
      %s45 = sphi 0, %s43
      %s46 = sphi 0, %s44
      %s47 = sphi 0, %s45
      %s57 = sphi 0, %s59
      %s60 = sphi 0, %s57
      %s61 = sphi 0, %s60
      %s77 = sphi 0, %s61
      %s83 = sphi 0, %s85
      %s86 = sphi 0, %s83
      %s87 = sphi 0, %s86
      %s103 = sphi 0, %s87
      %s107 = sphi 0, %s107
      %s109 = sphi 0, %s107
      %s110 = sphi 0, %s109
      %s124 = sphi 0, %s110
      %s128 = sphi 0, %s128
      %s130 = sphi 0, %s128
      %s131 = sphi 0, %s130
      %s145 = sphi 0, %s131
      %s149 = sphi 0, %s149
      %s151 = sphi 0, %s149
      %s152 = sphi 0, %s151
      %s166 = sphi 0, %s152
      %s172 = sphi 0, %s174
      %s175 = sphi 0, %s172
      %s176 = sphi 0, %s175
      %s192 = sphi 0, %s176
      %s198 = sphi 0, %s200
      %s201 = sphi 0, %s198
      %s202 = sphi 0, %s201
      %s218 = sphi 0, %s202
      %s224 = sphi 0, %s226
      %s227 = sphi 0, %s224
      %s228 = sphi 0, %s227
      %s244 = sphi 0, %s228
      %s250 = sphi 0, %s252
      %s253 = sphi 0, %s250
      %s254 = sphi 0, %s253
      %s270 = sphi 0, %s254
      %s276 = sphi 0, %s278
      %s279 = sphi 0, %s276
      %s280 = sphi 0, %s279
      %s296 = sphi 0, %s280
      %s302 = sphi 0, %s304
      %s305 = sphi 0, %s302
      %s306 = sphi 0, %s305
      %s322 = sphi 0, %s306
      %s328 = sphi 0, %s330
      %s331 = sphi 0, %s328
      %s332 = sphi 0, %s331
      %s348 = sphi 0, %s332
    $region4: #{tpu_custom_call.1} parent=1 // loop_header_branch
      %38 = sbr.rel (%p36) target = $region8
    $region5: #{tpu_custom_call.1} parent=1 // loop_body
      %s40 = ssub.s32 %s35, 1
      %s41 = ssub.s32 %s35, 2
      %s48 = sadd.s32 1, %s43
      %p49 = scmp.ge.s32.totalorder %s48, 4
      %s50 = scalar_select %p49, 0, %s48
      %s51 = sadd.s32 1, %s42
      %s52 = scalar_select %p49, %s51, %s42
      %p53 = scmp.ge.s32.totalorder %s52, 1
      %s54 = scalar_select %p53, 0, %s52
      %s55 = ssub.s32 %s42, %s54
      %p56 = scmp.eq.s32.totalorder %s55, 0
      %s58 = sadd.s32 %s57, 1
      %s59 = scalar_select %p56, %s57, %s58
      %p62 = pneg %p56
      %p63 = scmp.eq.s32.totalorder %s35, 3
      %p64 = por %p62, %p63
      %p65 = scmp.ne.s32.totalorder %s57, %s60
      %p66 = scmp.eq.s32.totalorder %s35, 0
      %p67 = por %p65, %p66
      %p68 = scmp.ne.s32.totalorder %s57, %s60
      %p69 = scmp.eq.s32.totalorder %s40, 3
      %p70 = por %p68, %p69
      %p71 = scmp.ne.s32.totalorder %s60, %s61
      %p72 = scmp.eq.s32.totalorder %s40, 0
      %p73 = por %p71, %p72
      %p74 = scmp.ne.s32.totalorder %s60, %s61
      %p75 = scmp.eq.s32.totalorder %s41, 3
      %p76 = por %p74, %p75
      %p78 = scmp.ne.s32.totalorder %s61, %s77
      %p79 = scmp.eq.s32.totalorder %s41, 0
      %p80 = por %p78, %p79
      %s81 = ssub.s32 %s42, %s54
      %p82 = scmp.eq.s32.totalorder %s81, 0
      %s84 = sadd.s32 %s83, 1
      %s85 = scalar_select %p82, %s83, %s84
      %p88 = pneg %p82
      %p89 = scmp.eq.s32.totalorder %s35, 3
      %p90 = por %p88, %p89
      %p91 = scmp.ne.s32.totalorder %s83, %s86
      %p92 = scmp.eq.s32.totalorder %s35, 0
      %p93 = por %p91, %p92
      %p94 = scmp.ne.s32.totalorder %s83, %s86
      %p95 = scmp.eq.s32.totalorder %s40, 3
      %p96 = por %p94, %p95
      %p97 = scmp.ne.s32.totalorder %s86, %s87
      %p98 = scmp.eq.s32.totalorder %s40, 0
      %p99 = por %p97, %p98
      %p100 = scmp.ne.s32.totalorder %s86, %s87
      %p101 = scmp.eq.s32.totalorder %s41, 3
      %p102 = por %p100, %p101
      %p104 = scmp.ne.s32.totalorder %s87, %s103
      %p105 = scmp.eq.s32.totalorder %s41, 0
      %p106 = por %p104, %p105
      %s108 = sadd.s32 %s107, 1
      %p111 = scmp.eq.s32.totalorder %s35, 3
      %p112 = scmp.ne.s32.totalorder %s107, %s109
      %p113 = scmp.eq.s32.totalorder %s35, 0
      %p114 = por %p112, %p113
      %p115 = scmp.ne.s32.totalorder %s107, %s109
      %p116 = scmp.eq.s32.totalorder %s40, 3
      %p117 = por %p115, %p116
      %p118 = scmp.ne.s32.totalorder %s109, %s110
      %p119 = scmp.eq.s32.totalorder %s40, 0
      %p120 = por %p118, %p119
      %p121 = scmp.ne.s32.totalorder %s109, %s110
      %p122 = scmp.eq.s32.totalorder %s41, 3
      %p123 = por %p121, %p122
      %p125 = scmp.ne.s32.totalorder %s110, %s124
      %p126 = scmp.eq.s32.totalorder %s41, 0
      %p127 = por %p125, %p126
      %s129 = sadd.s32 %s128, 1
      %p132 = scmp.eq.s32.totalorder %s35, 3
      %p133 = scmp.ne.s32.totalorder %s128, %s130
      %p134 = scmp.eq.s32.totalorder %s35, 0
      %p135 = por %p133, %p134
      %p136 = scmp.ne.s32.totalorder %s128, %s130
      %p137 = scmp.eq.s32.totalorder %s40, 3
      %p138 = por %p136, %p137
      %p139 = scmp.ne.s32.totalorder %s130, %s131
      %p140 = scmp.eq.s32.totalorder %s40, 0
      %p141 = por %p139, %p140
      %p142 = scmp.ne.s32.totalorder %s130, %s131
      %p143 = scmp.eq.s32.totalorder %s41, 3
      %p144 = por %p142, %p143
      %p146 = scmp.ne.s32.totalorder %s131, %s145
      %p147 = scmp.eq.s32.totalorder %s41, 0
      %p148 = por %p146, %p147
      %s150 = sadd.s32 %s149, 1
      %p153 = scmp.eq.s32.totalorder %s35, 3
      %p154 = scmp.ne.s32.totalorder %s149, %s151
      %p155 = scmp.eq.s32.totalorder %s35, 0
      %p156 = por %p154, %p155
      %p157 = scmp.ne.s32.totalorder %s149, %s151
      %p158 = scmp.eq.s32.totalorder %s40, 3
      %p159 = por %p157, %p158
      %p160 = scmp.ne.s32.totalorder %s151, %s152
      %p161 = scmp.eq.s32.totalorder %s40, 0
      %p162 = por %p160, %p161
      %p163 = scmp.ne.s32.totalorder %s151, %s152
      %p164 = scmp.eq.s32.totalorder %s41, 3
      %p165 = por %p163, %p164
      %p167 = scmp.ne.s32.totalorder %s152, %s166
      %p168 = scmp.eq.s32.totalorder %s41, 0
      %p169 = por %p167, %p168
      %s170 = ssub.s32 %s43, %s50
      %p171 = scmp.eq.s32.totalorder %s170, 0
      %s173 = sadd.s32 %s172, 1
      %s174 = scalar_select %p171, %s172, %s173
      %p177 = pneg %p171
      %p178 = scmp.eq.s32.totalorder %s35, 3
      %p179 = por %p177, %p178
      %p180 = scmp.ne.s32.totalorder %s172, %s175
      %p181 = scmp.eq.s32.totalorder %s35, 0
      %p182 = por %p180, %p181
      %p183 = scmp.ne.s32.totalorder %s172, %s175
      %p184 = scmp.eq.s32.totalorder %s40, 3
      %p185 = por %p183, %p184
      %p186 = scmp.ne.s32.totalorder %s175, %s176
      %p187 = scmp.eq.s32.totalorder %s40, 0
      %p188 = por %p186, %p187
      %p189 = scmp.ne.s32.totalorder %s175, %s176
      %p190 = scmp.eq.s32.totalorder %s41, 3
      %p191 = por %p189, %p190
      %p193 = scmp.ne.s32.totalorder %s176, %s192
      %p194 = scmp.eq.s32.totalorder %s41, 0
      %p195 = por %p193, %p194
      %s196 = ssub.s32 %s43, %s50
      %p197 = scmp.eq.s32.totalorder %s196, 0
      %s199 = sadd.s32 %s198, 1
      %s200 = scalar_select %p197, %s198, %s199
      %p203 = pneg %p197
      %p204 = scmp.eq.s32.totalorder %s35, 3
      %p205 = por %p203, %p204
      %p206 = scmp.ne.s32.totalorder %s198, %s201
      %p207 = scmp.eq.s32.totalorder %s35, 0
      %p208 = por %p206, %p207
      %p209 = scmp.ne.s32.totalorder %s198, %s201
      %p210 = scmp.eq.s32.totalorder %s40, 3
      %p211 = por %p209, %p210
      %p212 = scmp.ne.s32.totalorder %s201, %s202
      %p213 = scmp.eq.s32.totalorder %s40, 0
      %p214 = por %p212, %p213
      %p215 = scmp.ne.s32.totalorder %s201, %s202
      %p216 = scmp.eq.s32.totalorder %s41, 3
      %p217 = por %p215, %p216
      %p219 = scmp.ne.s32.totalorder %s202, %s218
      %p220 = scmp.eq.s32.totalorder %s41, 0
      %p221 = por %p219, %p220
      %s222 = ssub.s32 %s43, %s50
      %p223 = scmp.eq.s32.totalorder %s222, 0
      %s225 = sadd.s32 %s224, 1
      %s226 = scalar_select %p223, %s224, %s225
      %p229 = pneg %p223
      %p230 = scmp.eq.s32.totalorder %s35, 3
      %p231 = por %p229, %p230
      %p232 = scmp.ne.s32.totalorder %s224, %s227
      %p233 = scmp.eq.s32.totalorder %s35, 0
      %p234 = por %p232, %p233
      %p235 = scmp.ne.s32.totalorder %s224, %s227
      %p236 = scmp.eq.s32.totalorder %s40, 3
      %p237 = por %p235, %p236
      %p238 = scmp.ne.s32.totalorder %s227, %s228
      %p239 = scmp.eq.s32.totalorder %s40, 0
      %p240 = por %p238, %p239
      %p241 = scmp.ne.s32.totalorder %s227, %s228
      %p242 = scmp.eq.s32.totalorder %s41, 3
      %p243 = por %p241, %p242
      %p245 = scmp.ne.s32.totalorder %s228, %s244
      %p246 = scmp.eq.s32.totalorder %s41, 0
      %p247 = por %p245, %p246
      %s248 = ssub.s32 %s43, %s50
      %p249 = scmp.eq.s32.totalorder %s248, 0
      %s251 = sadd.s32 %s250, 1
      %s252 = scalar_select %p249, %s250, %s251
      %p255 = pneg %p249
      %p256 = scmp.eq.s32.totalorder %s35, 3
      %p257 = por %p255, %p256
      %p258 = scmp.ne.s32.totalorder %s250, %s253
      %p259 = scmp.eq.s32.totalorder %s35, 0
      %p260 = por %p258, %p259
      %p261 = scmp.ne.s32.totalorder %s250, %s253
      %p262 = scmp.eq.s32.totalorder %s40, 3
      %p263 = por %p261, %p262
      %p264 = scmp.ne.s32.totalorder %s253, %s254
      %p265 = scmp.eq.s32.totalorder %s40, 0
      %p266 = por %p264, %p265
      %p267 = scmp.ne.s32.totalorder %s253, %s254
      %p268 = scmp.eq.s32.totalorder %s41, 3
      %p269 = por %p267, %p268
      %p271 = scmp.ne.s32.totalorder %s254, %s270
      %p272 = scmp.eq.s32.totalorder %s41, 0
      %p273 = por %p271, %p272
      %s274 = ssub.s32 %s43, %s50
      %p275 = scmp.eq.s32.totalorder %s274, 0
      %s277 = sadd.s32 %s276, 1
      %s278 = scalar_select %p275, %s276, %s277
      %p281 = pneg %p275
      %p282 = scmp.eq.s32.totalorder %s35, 3
      %p283 = por %p281, %p282
      %p284 = scmp.ne.s32.totalorder %s276, %s279
      %p285 = scmp.eq.s32.totalorder %s35, 0
      %p286 = por %p284, %p285
      %p287 = scmp.ne.s32.totalorder %s276, %s279
      %p288 = scmp.eq.s32.totalorder %s40, 3
      %p289 = por %p287, %p288
      %p290 = scmp.ne.s32.totalorder %s279, %s280
      %p291 = scmp.eq.s32.totalorder %s40, 0
      %p292 = por %p290, %p291
      %p293 = scmp.ne.s32.totalorder %s279, %s280
      %p294 = scmp.eq.s32.totalorder %s41, 3
      %p295 = por %p293, %p294
      %p297 = scmp.ne.s32.totalorder %s280, %s296
      %p298 = scmp.eq.s32.totalorder %s41, 0
      %p299 = por %p297, %p298
      %s300 = ssub.s32 %s43, %s50
      %p301 = scmp.eq.s32.totalorder %s300, 0
      %s303 = sadd.s32 %s302, 1
      %s304 = scalar_select %p301, %s302, %s303
      %p307 = pneg %p301
      %p308 = scmp.eq.s32.totalorder %s35, 3
      %p309 = por %p307, %p308
      %p310 = scmp.ne.s32.totalorder %s302, %s305
      %p311 = scmp.eq.s32.totalorder %s35, 0
      %p312 = por %p310, %p311
      %p313 = scmp.ne.s32.totalorder %s302, %s305
      %p314 = scmp.eq.s32.totalorder %s40, 3
      %p315 = por %p313, %p314
      %p316 = scmp.ne.s32.totalorder %s305, %s306
      %p317 = scmp.eq.s32.totalorder %s40, 0
      %p318 = por %p316, %p317
      %p319 = scmp.ne.s32.totalorder %s305, %s306
      %p320 = scmp.eq.s32.totalorder %s41, 3
      %p321 = por %p319, %p320
      %p323 = scmp.ne.s32.totalorder %s306, %s322
      %p324 = scmp.eq.s32.totalorder %s41, 0
      %p325 = por %p323, %p324
      %s326 = ssub.s32 %s42, %s54
      %p327 = scmp.eq.s32.totalorder %s326, 0
      %s329 = sadd.s32 %s328, 1
      %s330 = scalar_select %p327, %s328, %s329
      %p333 = pneg %p327
      %p334 = scmp.eq.s32.totalorder %s35, 3
      %p335 = por %p333, %p334
      %p336 = scmp.ne.s32.totalorder %s328, %s331
      %p337 = scmp.eq.s32.totalorder %s35, 0
      %p338 = por %p336, %p337
      %p339 = scmp.ne.s32.totalorder %s328, %s331
      %p340 = scmp.eq.s32.totalorder %s40, 3
      %p341 = por %p339, %p340
      %p342 = scmp.ne.s32.totalorder %s331, %s332
      %p343 = scmp.eq.s32.totalorder %s40, 0
      %p344 = por %p342, %p343
      %p345 = scmp.ne.s32.totalorder %s331, %s332
      %p346 = scmp.eq.s32.totalorder %s41, 3
      %p347 = por %p345, %p346
      %p349 = scmp.ne.s32.totalorder %s332, %s348
      %p350 = scmp.eq.s32.totalorder %s41, 0
      %p351 = por %p349, %p350
      %p352 = scmp.le.s32.totalorder 1, %s35
      %p353 = scmp.lt.s32.totalorder %s35, 5
      %p354 = pnand %p352, %p353
      %p355 = pneg %p354
      // Predicated region
      $region9: #{tpu_custom_call.1} parent=5 // pred_check
        _
      $region10: #{tpu_custom_call.1} parent=5 // pred_check_branch
        %357 = sbr.rel (%p354) target = $region12
      $region11: #{tpu_custom_call.1} parent=5 // pred_region
        %s358 = ssub.s32 %s35, 1
        // Predicated region
        $region13: #{tpu_custom_call.1} parent=11 // pred_check
          %p359 = pneg %p73
        $region14: #{tpu_custom_call.1} parent=11 // pred_check_branch
          %361 = sbr.rel (%p359) target = $region16
        $region15: #{tpu_custom_call.1} parent=11 // pred_region
          %s362 = smul.u32 2, %s44
          %s364 = ssub.s32 256, 256
          %365 = vsyncadd [#allocation8], %s364
          %s366 = smul.addr %s362, 128
          %s367 = scalar_lea.hbm %s1, %s366
          %s368 = sshll.u32 [#allocation7], 4
          %s369 = int_to_ptr.vmem [resolvable:$true] %s368
          %374 = dma.hbm_to_vmem [thread:$0]  %s367, 256, %s369, [#allocation8], 128, 128, 8
        $region16: #{tpu_custom_call.1} parent=11 // pred_fallthru
          _
        // Predicated region
        $region17: #{tpu_custom_call.1} parent=11 // pred_check
          %p375 = pneg %p99
        $region18: #{tpu_custom_call.1} parent=11 // pred_check_branch
          %377 = sbr.rel (%p375) target = $region20
        $region19: #{tpu_custom_call.1} parent=11 // pred_region
          %s378 = smul.u32 2, %s44
          %s380 = ssub.s32 128, 128
          %381 = vsyncadd [#allocation11], %s380
          %s382 = smul.addr %s378, 64
          %s383 = scalar_lea.hbm %s2, %s382
          %s384 = sshll.u32 [#allocation10], 4
          %s385 = int_to_ptr.vmem [resolvable:$true] %s384
          %390 = dma.hbm_to_vmem [thread:$0]  %s383, 128, %s385, [#allocation11], 64, 64, 4
        $region20: #{tpu_custom_call.1} parent=11 // pred_fallthru
          _
        // Predicated region
        $region21: #{tpu_custom_call.1} parent=11 // pred_check
          %p391 = pneg %p120
        $region22: #{tpu_custom_call.1} parent=11 // pred_check_branch
          %393 = sbr.rel (%p391) target = $region24
        $region23: #{tpu_custom_call.1} parent=11 // pred_region
          %s395 = ssub.s32 1024, 1024
          %396 = vsyncadd [#allocation11], %s395
          %s397 = sshll.u32 [#allocation12], 4
          %s398 = int_to_ptr.vmem [resolvable:$true] %s397
          %403 = dma.hbm_to_vmem [thread:$0]  %s3, 1024, %s398, [#allocation11], 64, 64, 4
        $region24: #{tpu_custom_call.1} parent=11 // pred_fallthru
          _
        // Predicated region
        $region25: #{tpu_custom_call.1} parent=11 // pred_check
          %p404 = pneg %p141
        $region26: #{tpu_custom_call.1} parent=11 // pred_check_branch
          %406 = sbr.rel (%p404) target = $region28
        $region27: #{tpu_custom_call.1} parent=11 // pred_region
          %s408 = ssub.s32 1024, 1024
          %409 = vsyncadd [#allocation14], %s408
          %s410 = sshll.u32 [#allocation13], 4
          %s411 = int_to_ptr.vmem [resolvable:$true] %s410
          %416 = dma.hbm_to_vmem [thread:$0]  %s4, 1024, %s411, [#allocation14], 64, 64, 4
        $region28: #{tpu_custom_call.1} parent=11 // pred_fallthru
          _
        // Predicated region
        $region29: #{tpu_custom_call.1} parent=11 // pred_check
          %p417 = pneg %p162
        $region30: #{tpu_custom_call.1} parent=11 // pred_check_branch
          %419 = sbr.rel (%p417) target = $region32
        $region31: #{tpu_custom_call.1} parent=11 // pred_region
          %s421 = ssub.s32 1024, 1024
          %422 = vsyncadd [#allocation14], %s421
          %s423 = sshll.u32 [#allocation15], 4
          %s424 = int_to_ptr.vmem [resolvable:$true] %s423
          %429 = dma.hbm_to_vmem [thread:$0]  %s5, 1024, %s424, [#allocation14], 64, 64, 4
        $region32: #{tpu_custom_call.1} parent=11 // pred_fallthru
          _
      $region12: #{tpu_custom_call.1} parent=5 // pred_fallthru
        _
      %p430 = scmp.lt.s32.totalorder %s35, 4
      // Predicated region
      $region33: #{tpu_custom_call.1} parent=5 // pred_check
        %p431 = pneg %p430
      $region34: #{tpu_custom_call.1} parent=5 // pred_check_branch
        %433 = sbr.rel (%p431) target = $region36
      $region35: #{tpu_custom_call.1} parent=5 // pred_region
        // Predicated region
        $region37: #{tpu_custom_call.1} parent=35 // pred_check
          %p434 = pneg %p182
        $region38: #{tpu_custom_call.1} parent=35 // pred_check_branch
          %436 = sbr.rel (%p434) target = $region40
        $region39: #{tpu_custom_call.1} parent=35 // pred_region
          %s437 = sand.u32 %s35, 1
          %s438 = scalar_lea.sflag [#allocation17], %s437
          %s439 = sand.u32 %s172, 1
          %s440 = smul.addr %s439, 64
          %s441 = scalar_lea.vmem [#allocation16], %s440
          %s443 = ssub.s32 1024, 1024
          %444 = vsyncadd %s438, %s443
          %s445 = smul.addr %s43, 16
          %s446 = smul.addr %s445, 64
          %s447 = scalar_lea.hbm %s6, %s446
          %s448 = sshll.u32 %s441, 4
          %s449 = int_to_ptr.vmem [resolvable:$true] %s448
          %454 = dma.hbm_to_vmem [thread:$0]  %s447, 1024, %s449, %s438, 64, 64, 4
        $region40: #{tpu_custom_call.1} parent=35 // pred_fallthru
          _
        // Predicated region
        $region41: #{tpu_custom_call.1} parent=35 // pred_check
          %p455 = pneg %p208
        $region42: #{tpu_custom_call.1} parent=35 // pred_check_branch
          %457 = sbr.rel (%p455) target = $region44
        $region43: #{tpu_custom_call.1} parent=35 // pred_region
          %s458 = sand.u32 %s35, 1
          %s459 = scalar_lea.sflag [#allocation17], %s458
          %s460 = sand.u32 %s198, 1
          %s461 = smul.addr %s460, 8
          %s462 = scalar_lea.vmem [#allocation18], %s461
          %s464 = ssub.s32 128, 128
          %465 = vsyncadd %s459, %s464
          %s466 = smul.addr %s43, 2
          %s467 = smul.addr %s466, 64
          %s468 = scalar_lea.hbm %s7, %s467
          %s469 = sshll.u32 %s462, 4
          %s470 = int_to_ptr.vmem [resolvable:$true] %s469
          %475 = dma.hbm_to_vmem [thread:$0]  %s468, 128, %s470, %s459, 64, 64, 4
        $region44: #{tpu_custom_call.1} parent=35 // pred_fallthru
          _
        // Predicated region
        $region45: #{tpu_custom_call.1} parent=35 // pred_check
          %p476 = pneg %p234
        $region46: #{tpu_custom_call.1} parent=35 // pred_check_branch
          %478 = sbr.rel (%p476) target = $region48
        $region47: #{tpu_custom_call.1} parent=35 // pred_region
          %s479 = sand.u32 %s35, 1
          %s480 = scalar_lea.sflag [#allocation20], %s479
          %s481 = sand.u32 %s224, 1
          %s482 = smul.addr %s481, 64
          %s483 = scalar_lea.vmem [#allocation19], %s482
          %s485 = ssub.s32 1024, 1024
          %486 = vsyncadd %s480, %s485
          %s487 = smul.addr %s43, 16
          %s488 = smul.addr %s487, 64
          %s489 = scalar_lea.hbm %s8, %s488
          %s490 = sshll.u32 %s483, 4
          %s491 = int_to_ptr.vmem [resolvable:$true] %s490
          %496 = dma.hbm_to_vmem [thread:$0]  %s489, 1024, %s491, %s480, 64, 64, 4
        $region48: #{tpu_custom_call.1} parent=35 // pred_fallthru
          _
        // Predicated region
        $region49: #{tpu_custom_call.1} parent=35 // pred_check
          %p497 = pneg %p260
        $region50: #{tpu_custom_call.1} parent=35 // pred_check_branch
          %499 = sbr.rel (%p497) target = $region52
        $region51: #{tpu_custom_call.1} parent=35 // pred_region
          %s500 = sand.u32 %s35, 1
          %s501 = scalar_lea.sflag [#allocation20], %s500
          %s502 = sand.u32 %s250, 1
          %s503 = smul.addr %s502, 8
          %s504 = scalar_lea.vmem [#allocation21], %s503
          %s506 = ssub.s32 128, 128
          %507 = vsyncadd %s501, %s506
          %s508 = smul.addr %s43, 2
          %s509 = smul.addr %s508, 64
          %s510 = scalar_lea.hbm %s9, %s509
          %s511 = sshll.u32 %s504, 4
          %s512 = int_to_ptr.vmem [resolvable:$true] %s511
          %517 = dma.hbm_to_vmem [thread:$0]  %s510, 128, %s512, %s501, 64, 64, 4
        $region52: #{tpu_custom_call.1} parent=35 // pred_fallthru
          _
        // Predicated region
        $region53: #{tpu_custom_call.1} parent=35 // pred_check
          %p518 = pneg %p286
        $region54: #{tpu_custom_call.1} parent=35 // pred_check_branch
          %520 = sbr.rel (%p518) target = $region56
        $region55: #{tpu_custom_call.1} parent=35 // pred_region
          %s521 = sand.u32 %s35, 1
          %s522 = scalar_lea.sflag [#allocation23], %s521
          %s523 = sand.u32 %s276, 1
          %s524 = smul.addr %s523, 64
          %s525 = scalar_lea.vmem [#allocation22], %s524
          %s527 = ssub.s32 1024, 1024
          %528 = vsyncadd %s522, %s527
          %s529 = smul.addr %s43, 16
          %s530 = smul.addr %s529, 64
          %s531 = scalar_lea.hbm %s10, %s530
          %s532 = sshll.u32 %s525, 4
          %s533 = int_to_ptr.vmem [resolvable:$true] %s532
          %538 = dma.hbm_to_vmem [thread:$0]  %s531, 1024, %s533, %s522, 64, 64, 4
        $region56: #{tpu_custom_call.1} parent=35 // pred_fallthru
          _
        // Predicated region
        $region57: #{tpu_custom_call.1} parent=35 // pred_check
          %p539 = pneg %p312
        $region58: #{tpu_custom_call.1} parent=35 // pred_check_branch
          %541 = sbr.rel (%p539) target = $region60
        $region59: #{tpu_custom_call.1} parent=35 // pred_region
          %s542 = sand.u32 %s35, 1
          %s543 = scalar_lea.sflag [#allocation23], %s542
          %s544 = sand.u32 %s302, 1
          %s545 = smul.addr %s544, 8
          %s546 = scalar_lea.vmem [#allocation24], %s545
          %s548 = ssub.s32 128, 128
          %549 = vsyncadd %s543, %s548
          %s550 = smul.addr %s43, 2
          %s551 = smul.addr %s550, 64
          %s552 = scalar_lea.hbm %s11, %s551
          %s553 = sshll.u32 %s546, 4
          %s554 = int_to_ptr.vmem [resolvable:$true] %s553
          %559 = dma.hbm_to_vmem [thread:$0]  %s552, 128, %s554, %s543, 64, 64, 4
        $region60: #{tpu_custom_call.1} parent=35 // pred_fallthru
          _
      $region36: #{tpu_custom_call.1} parent=5 // pred_fallthru
        _
      %p560 = scmp.le.s32.totalorder 1, %s35
      %p561 = scmp.lt.s32.totalorder %s35, 5
      %p562 = pnand %p560, %p561
      %p563 = pneg %p562
      // Predicated region
      $region61: #{tpu_custom_call.1} parent=5 // pred_check
        _
      $region62: #{tpu_custom_call.1} parent=5 // pred_check_branch
        %565 = sbr.rel (%p562) target = $region64
      $region63: #{tpu_custom_call.1} parent=5 // pred_region
        %s566 = ssub.s32 %s35, 1
        // Predicated region
        $region65: #{tpu_custom_call.1} parent=63 // pred_check
          %p567 = pneg %p73
        $region66: #{tpu_custom_call.1} parent=63 // pred_check_branch
          %569 = sbr.rel (%p567) target = $region68
        $region67: #{tpu_custom_call.1} parent=63 // pred_region
          %570 = dma.done [#allocation8], 256
        $region68: #{tpu_custom_call.1} parent=63 // pred_fallthru
          _
        // Predicated region
        $region69: #{tpu_custom_call.1} parent=63 // pred_check
          %p571 = pneg %p99
        $region70: #{tpu_custom_call.1} parent=63 // pred_check_branch
          %573 = sbr.rel (%p571) target = $region72
        $region71: #{tpu_custom_call.1} parent=63 // pred_region
          %574 = dma.done [#allocation11], 128
        $region72: #{tpu_custom_call.1} parent=63 // pred_fallthru
          _
        // Predicated region
        $region73: #{tpu_custom_call.1} parent=63 // pred_check
          %p575 = pneg %p120
        $region74: #{tpu_custom_call.1} parent=63 // pred_check_branch
          %577 = sbr.rel (%p575) target = $region76
        $region75: #{tpu_custom_call.1} parent=63 // pred_region
          %578 = dma.done [#allocation11], 1024
        $region76: #{tpu_custom_call.1} parent=63 // pred_fallthru
          _
        // Predicated region
        $region77: #{tpu_custom_call.1} parent=63 // pred_check
          %p579 = pneg %p141
        $region78: #{tpu_custom_call.1} parent=63 // pred_check_branch
          %581 = sbr.rel (%p579) target = $region80
        $region79: #{tpu_custom_call.1} parent=63 // pred_region
          %582 = dma.done [#allocation14], 1024
        $region80: #{tpu_custom_call.1} parent=63 // pred_fallthru
          _
        // Predicated region
        $region81: #{tpu_custom_call.1} parent=63 // pred_check
          %p583 = pneg %p162
        $region82: #{tpu_custom_call.1} parent=63 // pred_check_branch
          %585 = sbr.rel (%p583) target = $region84
        $region83: #{tpu_custom_call.1} parent=63 // pred_region
          %586 = dma.done [#allocation14], 1024
        $region84: #{tpu_custom_call.1} parent=63 // pred_fallthru
          _
        %s587 = sand.u32 %s40, 1
        %s588 = scalar_lea.sflag [#allocation17], %s587
        %s589 = sand.u32 %s175, 1
        %s590 = smul.addr %s589, 64
        %s591 = scalar_lea.vmem [#allocation16], %s590
        // Predicated region
        $region85: #{tpu_custom_call.1} parent=63 // pred_check
          %p592 = pneg %p188
        $region86: #{tpu_custom_call.1} parent=63 // pred_check_branch
          %594 = sbr.rel (%p592) target = $region88
        $region87: #{tpu_custom_call.1} parent=63 // pred_region
          %595 = dma.done %s588, 1024
        $region88: #{tpu_custom_call.1} parent=63 // pred_fallthru
          _
        %s596 = sand.u32 %s40, 1
        %s597 = scalar_lea.sflag [#allocation17], %s596
        %s598 = sand.u32 %s201, 1
        %s599 = smul.addr %s598, 8
        %s600 = scalar_lea.vmem [#allocation18], %s599
        // Predicated region
        $region89: #{tpu_custom_call.1} parent=63 // pred_check
          %p601 = pneg %p214
        $region90: #{tpu_custom_call.1} parent=63 // pred_check_branch
          %603 = sbr.rel (%p601) target = $region92
        $region91: #{tpu_custom_call.1} parent=63 // pred_region
          %604 = dma.done %s597, 128
        $region92: #{tpu_custom_call.1} parent=63 // pred_fallthru
          _
        %s605 = sand.u32 %s40, 1
        %s606 = scalar_lea.sflag [#allocation20], %s605
        %s607 = sand.u32 %s227, 1
        %s608 = smul.addr %s607, 64
        %s609 = scalar_lea.vmem [#allocation19], %s608
        // Predicated region
        $region93: #{tpu_custom_call.1} parent=63 // pred_check
          %p610 = pneg %p240
        $region94: #{tpu_custom_call.1} parent=63 // pred_check_branch
          %612 = sbr.rel (%p610) target = $region96
        $region95: #{tpu_custom_call.1} parent=63 // pred_region
          %613 = dma.done %s606, 1024
        $region96: #{tpu_custom_call.1} parent=63 // pred_fallthru
          _
        %s614 = sand.u32 %s40, 1
        %s615 = scalar_lea.sflag [#allocation20], %s614
        %s616 = sand.u32 %s253, 1
        %s617 = smul.addr %s616, 8
        %s618 = scalar_lea.vmem [#allocation21], %s617
        // Predicated region
        $region97: #{tpu_custom_call.1} parent=63 // pred_check
          %p619 = pneg %p266
        $region98: #{tpu_custom_call.1} parent=63 // pred_check_branch
          %621 = sbr.rel (%p619) target = $region100
        $region99: #{tpu_custom_call.1} parent=63 // pred_region
          %622 = dma.done %s615, 128
        $region100: #{tpu_custom_call.1} parent=63 // pred_fallthru
          _
        %s623 = sand.u32 %s40, 1
        %s624 = scalar_lea.sflag [#allocation23], %s623
        %s625 = sand.u32 %s279, 1
        %s626 = smul.addr %s625, 64
        %s627 = scalar_lea.vmem [#allocation22], %s626
        // Predicated region
        $region101: #{tpu_custom_call.1} parent=63 // pred_check
          %p628 = pneg %p292
        $region102: #{tpu_custom_call.1} parent=63 // pred_check_branch
          %630 = sbr.rel (%p628) target = $region104
        $region103: #{tpu_custom_call.1} parent=63 // pred_region
          %631 = dma.done %s624, 1024
        $region104: #{tpu_custom_call.1} parent=63 // pred_fallthru
          _
        %s632 = sand.u32 %s40, 1
        %s633 = scalar_lea.sflag [#allocation23], %s632
        %s634 = sand.u32 %s305, 1
        %s635 = smul.addr %s634, 8
        %s636 = scalar_lea.vmem [#allocation24], %s635
        // Predicated region
        $region105: #{tpu_custom_call.1} parent=63 // pred_check
          %p637 = pneg %p318
        $region106: #{tpu_custom_call.1} parent=63 // pred_check_branch
          %639 = sbr.rel (%p637) target = $region108
        $region107: #{tpu_custom_call.1} parent=63 // pred_region
          %640 = dma.done %s633, 128
        $region108: #{tpu_custom_call.1} parent=63 // pred_fallthru
          _
        %p641 = pneg %p73
        %p642 = pneg %p70
        %p643 = pneg %p99
        %p644 = pneg %p96
        %p645 = pneg %p120
        %p646 = pneg %p117
        %p647 = pneg %p141
        %p648 = pneg %p138
        %p649 = pneg %p162
        %p650 = pneg %p159
        %s651 = sand.u32 %s40, 1
        %s652 = scalar_lea.sflag [#allocation17], %s651
        %s653 = sand.u32 %s175, 1
        %s654 = smul.addr %s653, 64
        %s655 = scalar_lea.vmem [#allocation16], %s654
        %p656 = pneg %p188
        %p657 = pneg %p185
        %s658 = sand.u32 %s40, 1
        %s659 = scalar_lea.sflag [#allocation17], %s658
        %s660 = sand.u32 %s201, 1
        %s661 = smul.addr %s660, 8
        %s662 = scalar_lea.vmem [#allocation18], %s661
        %p663 = pneg %p214
        %p664 = pneg %p211
        %s665 = sand.u32 %s40, 1
        %s666 = scalar_lea.sflag [#allocation20], %s665
        %s667 = sand.u32 %s227, 1
        %s668 = smul.addr %s667, 64
        %s669 = scalar_lea.vmem [#allocation19], %s668
        %p670 = pneg %p240
        %p671 = pneg %p237
        %s672 = sand.u32 %s40, 1
        %s673 = scalar_lea.sflag [#allocation20], %s672
        %s674 = sand.u32 %s253, 1
        %s675 = smul.addr %s674, 8
        %s676 = scalar_lea.vmem [#allocation21], %s675
        %p677 = pneg %p266
        %p678 = pneg %p263
        %s679 = sand.u32 %s40, 1
        %s680 = scalar_lea.sflag [#allocation23], %s679
        %s681 = sand.u32 %s279, 1
        %s682 = smul.addr %s681, 64
        %s683 = scalar_lea.vmem [#allocation22], %s682
        %p684 = pneg %p292
        %p685 = pneg %p289
        %s686 = sand.u32 %s40, 1
        %s687 = scalar_lea.sflag [#allocation23], %s686
        %s688 = sand.u32 %s305, 1
        %s689 = smul.addr %s688, 8
        %s690 = scalar_lea.vmem [#allocation24], %s689
        %p691 = pneg %p318
        %p692 = pneg %p315
        %p693 = pneg %p344
        %p694 = pneg %p341
        %s695 = smul.u32 2, %s44
        %s696 = smul.u32 2, %s44
        %s697 = smul.u32 2, %s44
        %p699 = scmp.eq.s32.totalorder %s45, 0
        // Predicated region
        $region109: #{tpu_custom_call.1} parent=63 // pred_check
          %p700 = pneg %p699
        $region110: #{tpu_custom_call.1} parent=63 // pred_check_branch
          %702 = sbr.rel (%p700) target = $region112
        $region111: #{tpu_custom_call.1} parent=63 // pred_region
          %v703 = vld [vmem:[#allocation10] sm:$0xf]
          %v704 = vld [vmem:[#allocation10 + $0x4] sm:$0xf]
          %v705 = vld [vmem:[#allocation12] sm:$0xf]
          %v706 = vld [vmem:[#allocation12 + $0x4] sm:$0xf]
          %v707 = vld [vmem:[#allocation12 + $0x8] sm:$0xf]
          %v708 = vld [vmem:[#allocation12 + $0xc] sm:$0xf]
          %v709 = vld [vmem:[#allocation12 + $0x10] sm:$0xf]
          %v710 = vld [vmem:[#allocation12 + $0x14] sm:$0xf]
          %v711 = vld [vmem:[#allocation12 + $0x18] sm:$0xf]
          %v712 = vld [vmem:[#allocation12 + $0x1c] sm:$0xf]
          %v713 = vld [vmem:[#allocation12 + $0x20] sm:$0xf]
          %v714 = vld [vmem:[#allocation12 + $0x24] sm:$0xf]
          %v715 = vld [vmem:[#allocation12 + $0x28] sm:$0xf]
          %v716 = vld [vmem:[#allocation12 + $0x2c] sm:$0xf]
          %v717 = vld [vmem:[#allocation12 + $0x30] sm:$0xf]
          %v718 = vld [vmem:[#allocation12 + $0x34] sm:$0xf]
          %v719 = vld [vmem:[#allocation12 + $0x38] sm:$0xf]
          %v720 = vld [vmem:[#allocation12 + $0x3c] sm:$0xf]
          %v723 = vunpack.c.l.b16 %v703
          %v724 = vunpack.c.l.b16 %v704
          %v725 = vpack.c.b16 %v724, %v723
          %v743 = vunpack.c.l.b16 %v705
          %v744 = vunpack.c.l.b16 %v706
          %v745 = vunpack.c.l.b16 %v707
          %v746 = vunpack.c.l.b16 %v708
          %v747 = vunpack.c.l.b16 %v709
          %v748 = vunpack.c.l.b16 %v710
          %v749 = vunpack.c.l.b16 %v711
          %v750 = vunpack.c.l.b16 %v712
          %v751 = vunpack.c.l.b16 %v713
          %v752 = vunpack.c.l.b16 %v714
          %v753 = vunpack.c.l.b16 %v715
          %v754 = vunpack.c.l.b16 %v716
          %v755 = vunpack.c.l.b16 %v717
          %v756 = vunpack.c.l.b16 %v718
          %v757 = vunpack.c.l.b16 %v719
          %v758 = vunpack.c.l.b16 %v720
          %v759 = vpack.c.b16 %v744, %v743
          %v760 = vpack.c.b16 %v746, %v745
          %v761 = vpack.c.b16 %v748, %v747
          %v762 = vpack.c.b16 %v750, %v749
          %v763 = vpack.c.b16 %v752, %v751
          %v764 = vpack.c.b16 %v754, %v753
          %v765 = vpack.c.b16 %v756, %v755
          %v766 = vpack.c.b16 %v758, %v757
          %775 = vmatprep.subr.bf16.mxu0 0
          %776 = vmatpush1.bf16.xpose.msra.mxu0 %v759
          %777 = vmatprep.subr.bf16.mxu0 0
          %778 = vmatpush1.bf16.xpose.msra.mxu0 %v760
          %779 = vmatprep.subr.bf16.mxu0 0
          %780 = vmatpush1.bf16.xpose.msra.mxu0 %v761
          %781 = vmatprep.subr.bf16.mxu0 0
          %782 = vmatpush1.bf16.xpose.msra.mxu0 %v762
          %783 = vmatprep.subr.bf16.mxu0 0
          %784 = vmatpush1.bf16.xpose.msra.mxu0 %v763
          %785 = vmatprep.subr.bf16.mxu0 0
          %786 = vmatpush1.bf16.xpose.msra.mxu0 %v764
          %787 = vmatprep.subr.bf16.mxu0 0
          %788 = vmatpush1.bf16.xpose.msra.mxu0 %v765
          %789 = vmatprep.subr.bf16.mxu0 0
          %790 = vmatpush1.bf16.xpose.msra.mxu0 %v766
          %791 = vmatprep.subr.bf16.mxu0 0
          %792 = vmatpush1.bf16.xpose.msra.mxu0 0
          %793 = vmatprep.subr.bf16.mxu0 0
          %794 = vmatpush1.bf16.xpose.msra.mxu0 0
          %795 = vmatprep.subr.bf16.mxu0 0
          %796 = vmatpush1.bf16.xpose.msra.mxu0 0
          %797 = vmatprep.subr.bf16.mxu0 0
          %798 = vmatpush1.bf16.xpose.msra.mxu0 0
          %799 = vmatprep.subr.bf16.mxu0 0
          %800 = vmatpush1.bf16.xpose.msra.mxu0 0
          %801 = vmatprep.subr.bf16.mxu0 0
          %802 = vmatpush1.bf16.xpose.msra.mxu0 0
          %803 = vmatprep.subr.bf16.mxu0 0
          %804 = vmatpush1.bf16.xpose.msra.mxu0 0
          %805 = vmatprep.subr.bf16.mxu0 0
          %806 = vmatpush1.bf16.xpose.msra.mxu0 0
          %807 = vmatprep.mubr.bf16.mxu0 0
          %808 = vmatmul.mubr.bf16.gmra.mrb[0].mxu0 %v725
          %v809 = vpop.f32.mrb[0].mxu0
          %v810 = vadd.f32 0.0, %v809
          %v811 = vpop.f32.mrb[0].mxu0
          %v812 = vpop.f32.mrb[0].mxu0
          %v813 = vadd.f32 0.0, %v812
          %v814 = vpop.f32.mrb[0].mxu0
          %815 = vdwg.mxu0
          %816 = vst [vmem:[#allocation2] sm:$0xff] %v810
          %817 = vst [vmem:[#allocation2 + $0x8] sm:$0xff] %v813
          %v818 = vld [vmem:[#allocation13] sm:$0xf]
          %v819 = vld [vmem:[#allocation13 + $0x4] sm:$0xf]
          %v820 = vld [vmem:[#allocation13 + $0x8] sm:$0xf]
          %v821 = vld [vmem:[#allocation13 + $0xc] sm:$0xf]
          %v822 = vld [vmem:[#allocation13 + $0x10] sm:$0xf]
          %v823 = vld [vmem:[#allocation13 + $0x14] sm:$0xf]
          %v824 = vld [vmem:[#allocation13 + $0x18] sm:$0xf]
          %v825 = vld [vmem:[#allocation13 + $0x1c] sm:$0xf]
          %v826 = vld [vmem:[#allocation13 + $0x20] sm:$0xf]
          %v827 = vld [vmem:[#allocation13 + $0x24] sm:$0xf]
          %v828 = vld [vmem:[#allocation13 + $0x28] sm:$0xf]
          %v829 = vld [vmem:[#allocation13 + $0x2c] sm:$0xf]
          %v830 = vld [vmem:[#allocation13 + $0x30] sm:$0xf]
          %v831 = vld [vmem:[#allocation13 + $0x34] sm:$0xf]
          %v832 = vld [vmem:[#allocation13 + $0x38] sm:$0xf]
          %v833 = vld [vmem:[#allocation13 + $0x3c] sm:$0xf]
          %v850 = vunpack.c.l.b16 %v818
          %v851 = vunpack.c.l.b16 %v819
          %v852 = vunpack.c.l.b16 %v820
          %v853 = vunpack.c.l.b16 %v821
          %v854 = vunpack.c.l.b16 %v822
          %v855 = vunpack.c.l.b16 %v823
          %v856 = vunpack.c.l.b16 %v824
          %v857 = vunpack.c.l.b16 %v825
          %v858 = vunpack.c.l.b16 %v826
          %v859 = vunpack.c.l.b16 %v827
          %v860 = vunpack.c.l.b16 %v828
          %v861 = vunpack.c.l.b16 %v829
          %v862 = vunpack.c.l.b16 %v830
          %v863 = vunpack.c.l.b16 %v831
          %v864 = vunpack.c.l.b16 %v832
          %v865 = vunpack.c.l.b16 %v833
          %v866 = vpack.c.b16 %v851, %v850
          %v867 = vpack.c.b16 %v853, %v852
          %v868 = vpack.c.b16 %v855, %v854
          %v869 = vpack.c.b16 %v857, %v856
          %v870 = vpack.c.b16 %v859, %v858
          %v871 = vpack.c.b16 %v861, %v860
          %v872 = vpack.c.b16 %v863, %v862
          %v873 = vpack.c.b16 %v865, %v864
          %882 = vmatprep.subr.bf16.mxu0 0
          %883 = vmatpush1.bf16.xpose.msra.mxu0 %v866
          %884 = vmatprep.subr.bf16.mxu0 0
          %885 = vmatpush1.bf16.xpose.msra.mxu0 %v867
          %886 = vmatprep.subr.bf16.mxu0 0
          %887 = vmatpush1.bf16.xpose.msra.mxu0 %v868
          %888 = vmatprep.subr.bf16.mxu0 0
          %889 = vmatpush1.bf16.xpose.msra.mxu0 %v869
          %890 = vmatprep.subr.bf16.mxu0 0
          %891 = vmatpush1.bf16.xpose.msra.mxu0 %v870
          %892 = vmatprep.subr.bf16.mxu0 0
          %893 = vmatpush1.bf16.xpose.msra.mxu0 %v871
          %894 = vmatprep.subr.bf16.mxu0 0
          %895 = vmatpush1.bf16.xpose.msra.mxu0 %v872
          %896 = vmatprep.subr.bf16.mxu0 0
          %897 = vmatpush1.bf16.xpose.msra.mxu0 %v873
          %898 = vmatprep.subr.bf16.mxu0 0
          %899 = vmatpush1.bf16.xpose.msra.mxu0 0
          %900 = vmatprep.subr.bf16.mxu0 0
          %901 = vmatpush1.bf16.xpose.msra.mxu0 0
          %902 = vmatprep.subr.bf16.mxu0 0
          %903 = vmatpush1.bf16.xpose.msra.mxu0 0
          %904 = vmatprep.subr.bf16.mxu0 0
          %905 = vmatpush1.bf16.xpose.msra.mxu0 0
          %906 = vmatprep.subr.bf16.mxu0 0
          %907 = vmatpush1.bf16.xpose.msra.mxu0 0
          %908 = vmatprep.subr.bf16.mxu0 0
          %909 = vmatpush1.bf16.xpose.msra.mxu0 0
          %910 = vmatprep.subr.bf16.mxu0 0
          %911 = vmatpush1.bf16.xpose.msra.mxu0 0
          %912 = vmatprep.subr.bf16.mxu0 0
          %913 = vmatpush1.bf16.xpose.msra.mxu0 0
          %914 = vmatprep.mubr.bf16.mxu0 0
          %915 = vmatmul.mubr.bf16.gmra.mrb[0].mxu0 %v725
          %v916 = vpop.f32.mrb[0].mxu0
          %v917 = vadd.f32 0.0, %v916
          %v918 = vpop.f32.mrb[0].mxu0
          %v919 = vpop.f32.mrb[0].mxu0
          %v920 = vadd.f32 0.0, %v919
          %v921 = vpop.f32.mrb[0].mxu0
          %922 = vdwg.mxu0
          %923 = vst [vmem:[#allocation3] sm:$0xff] %v917
          %924 = vst [vmem:[#allocation3 + $0x8] sm:$0xff] %v920
          %925 = vst [vmem:[#allocation4] sm:$0xff] 0.0
          %926 = vst [vmem:[#allocation4 + $0x8] sm:$0xff] 0.0
        $region112: #{tpu_custom_call.1} parent=63 // pred_fallthru
          _
        %s927 = sshra.s32 %s45, 7
        %s928 = sand.u32 %s45, 127
        %s929 = sadd.s32 %s927, %s44
        %s930 = smul.u32 %s929, 128
        %s931 = sshra.s32 %s45, 7
        %s932 = sand.u32 %s45, 127
        %s933 = sadd.s32 %s930, %s932
        %s934 = sld [smem:[#allocation6 + %s933]]
        %p935 = scmp.gt.s32.totalorder %s934, 0
        // Predicated region
        $region113: #{tpu_custom_call.1} parent=63 // pred_check
          %p936 = pneg %p935
        $region114: #{tpu_custom_call.1} parent=63 // pred_check_branch
          %938 = sbr.rel (%p936) target = $region116
        $region115: #{tpu_custom_call.1} parent=63 // pred_region
          %v939 = vld [vmem:[#allocation10] sm:$0xf]
          %v940 = vld [vmem:[#allocation10 + $0x4] sm:$0xf]
          %v941 = vld [vmem:[%s600] sm:$0xf]
          %v942 = vld [vmem:[%s600 + $0x4] sm:$0xf]
          %v945 = vunpack.c.l.b16 %v939
          %v946 = vunpack.c.l.b16 %v940
          %v947 = vpack.c.b16 %v946, %v945
          %v951 = vunpack.c.l.b16 %v941
          %v952 = vunpack.c.l.b16 %v942
          %v953 = vpack.c.b16 %v952, %v951
          %955 = vmatprep.subr.bf16.mxu0 0
          %956 = vmatpush1.bf16.xpose.msra.mxu0 %v953
          %957 = vmatprep.subr.bf16.mxu0 0
          %958 = vmatpush1.bf16.xpose.msra.mxu0 0
          %959 = vmatprep.subr.bf16.mxu0 0
          %960 = vmatpush1.bf16.xpose.msra.mxu0 0
          %961 = vmatprep.subr.bf16.mxu0 0
          %962 = vmatpush1.bf16.xpose.msra.mxu0 0
          %963 = vmatprep.subr.bf16.mxu0 0
          %964 = vmatpush1.bf16.xpose.msra.mxu0 0
          %965 = vmatprep.subr.bf16.mxu0 0
          %966 = vmatpush1.bf16.xpose.msra.mxu0 0
          %967 = vmatprep.subr.bf16.mxu0 0
          %968 = vmatpush1.bf16.xpose.msra.mxu0 0
          %969 = vmatprep.subr.bf16.mxu0 0
          %970 = vmatpush1.bf16.xpose.msra.mxu0 0
          %971 = vmatprep.subr.bf16.mxu0 0
          %972 = vmatpush1.bf16.xpose.msra.mxu0 0
          %973 = vmatprep.subr.bf16.mxu0 0
          %974 = vmatpush1.bf16.xpose.msra.mxu0 0
          %975 = vmatprep.subr.bf16.mxu0 0
          %976 = vmatpush1.bf16.xpose.msra.mxu0 0
          %977 = vmatprep.subr.bf16.mxu0 0
          %978 = vmatpush1.bf16.xpose.msra.mxu0 0
          %979 = vmatprep.subr.bf16.mxu0 0
          %980 = vmatpush1.bf16.xpose.msra.mxu0 0
          %981 = vmatprep.subr.bf16.mxu0 0
          %982 = vmatpush1.bf16.xpose.msra.mxu0 0
          %983 = vmatprep.subr.bf16.mxu0 0
          %984 = vmatpush1.bf16.xpose.msra.mxu0 0
          %985 = vmatprep.subr.bf16.mxu0 0
          %986 = vmatpush1.bf16.xpose.msra.mxu0 0
          %987 = vmatprep.mubr.bf16.mxu0 0
          %988 = vmatmul.mubr.bf16.gmra.mrb[0].mxu0 %v947
          %v989 = vpop.f32.mrb[0].mxu0
          %v990 = vadd.f32 0.0, %v989
          %v991 = vpop.f32.mrb[0].mxu0
          %v992 = vpop.f32.mrb[0].mxu0
          %v993 = vadd.f32 0.0, %v992
          %v994 = vpop.f32.mrb[0].mxu0
          %995 = vdwg.mxu0
          %v996 = vpack.c.bf16 %v993, %v990
          %v997 = vld [vmem:[%s591] sm:$0xf]
          %v998 = vld [vmem:[%s591 + $0x4] sm:$0xf]
          %v999 = vld [vmem:[%s591 + $0x8] sm:$0xf]
          %v1000 = vld [vmem:[%s591 + $0xc] sm:$0xf]
          %v1001 = vld [vmem:[%s591 + $0x10] sm:$0xf]
          %v1002 = vld [vmem:[%s591 + $0x14] sm:$0xf]
          %v1003 = vld [vmem:[%s591 + $0x18] sm:$0xf]
          %v1004 = vld [vmem:[%s591 + $0x1c] sm:$0xf]
          %v1005 = vld [vmem:[%s591 + $0x20] sm:$0xf]
          %v1006 = vld [vmem:[%s591 + $0x24] sm:$0xf]
          %v1007 = vld [vmem:[%s591 + $0x28] sm:$0xf]
          %v1008 = vld [vmem:[%s591 + $0x2c] sm:$0xf]
          %v1009 = vld [vmem:[%s591 + $0x30] sm:$0xf]
          %v1010 = vld [vmem:[%s591 + $0x34] sm:$0xf]
          %v1011 = vld [vmem:[%s591 + $0x38] sm:$0xf]
          %v1012 = vld [vmem:[%s591 + $0x3c] sm:$0xf]
          %v1029 = vunpack.c.l.b16 %v997
          %v1030 = vunpack.c.l.b16 %v998
          %v1031 = vunpack.c.l.b16 %v999
          %v1032 = vunpack.c.l.b16 %v1000
          %v1033 = vunpack.c.l.b16 %v1001
          %v1034 = vunpack.c.l.b16 %v1002
          %v1035 = vunpack.c.l.b16 %v1003
          %v1036 = vunpack.c.l.b16 %v1004
          %v1037 = vunpack.c.l.b16 %v1005
          %v1038 = vunpack.c.l.b16 %v1006
          %v1039 = vunpack.c.l.b16 %v1007
          %v1040 = vunpack.c.l.b16 %v1008
          %v1041 = vunpack.c.l.b16 %v1009
          %v1042 = vunpack.c.l.b16 %v1010
          %v1043 = vunpack.c.l.b16 %v1011
          %v1044 = vunpack.c.l.b16 %v1012
          %v1045 = vpack.c.b16 %v1030, %v1029
          %v1046 = vpack.c.b16 %v1032, %v1031
          %v1047 = vpack.c.b16 %v1034, %v1033
          %v1048 = vpack.c.b16 %v1036, %v1035
          %v1049 = vpack.c.b16 %v1038, %v1037
          %v1050 = vpack.c.b16 %v1040, %v1039
          %v1051 = vpack.c.b16 %v1042, %v1041
          %v1052 = vpack.c.b16 %v1044, %v1043
          %vm1053 = vcmask 130048
          %v1055 = vsel %vm1053, %v996, 0
          %v1058 = vsel %vm1053, %v1045, 0
          %v1061 = vsel %vm1053, %v1046, 0
          %v1064 = vsel %vm1053, %v1047, 0
          %v1067 = vsel %vm1053, %v1048, 0
          %v1070 = vsel %vm1053, %v1049, 0
          %v1073 = vsel %vm1053, %v1050, 0
          %v1076 = vsel %vm1053, %v1051, 0
          %v1079 = vsel %vm1053, %v1052, 0
          %1081 = vmatprep.subr.bf16.mxu0 0
          %1082 = vmatpush1.bf16.xpose.msra.mxu0 %v1058
          %1083 = vmatprep.subr.bf16.mxu0 0
          %1084 = vmatpush1.bf16.xpose.msra.mxu0 %v1061
          %1085 = vmatprep.subr.bf16.mxu0 0
          %1086 = vmatpush1.bf16.xpose.msra.mxu0 %v1064
          %1087 = vmatprep.subr.bf16.mxu0 0
          %1088 = vmatpush1.bf16.xpose.msra.mxu0 %v1067
          %1089 = vmatprep.subr.bf16.mxu0 0
          %1090 = vmatpush1.bf16.xpose.msra.mxu0 %v1070
          %1091 = vmatprep.subr.bf16.mxu0 0
          %1092 = vmatpush1.bf16.xpose.msra.mxu0 %v1073
          %1093 = vmatprep.subr.bf16.mxu0 0
          %1094 = vmatpush1.bf16.xpose.msra.mxu0 %v1076
          %1095 = vmatprep.subr.bf16.mxu0 0
          %1096 = vmatpush1.bf16.xpose.msra.mxu0 %v1079
          %1097 = vmatprep.subr.bf16.mxu0 0
          %1098 = vmatpush1.bf16.xpose.msra.mxu0 0
          %1099 = vmatprep.subr.bf16.mxu0 0
          %1100 = vmatpush1.bf16.xpose.msra.mxu0 0
          %1101 = vmatprep.subr.bf16.mxu0 0
          %1102 = vmatpush1.bf16.xpose.msra.mxu0 0
          %1103 = vmatprep.subr.bf16.mxu0 0
          %1104 = vmatpush1.bf16.xpose.msra.mxu0 0
          %1105 = vmatprep.subr.bf16.mxu0 0
          %1106 = vmatpush1.bf16.xpose.msra.mxu0 0
          %1107 = vmatprep.subr.bf16.mxu0 0
          %1108 = vmatpush1.bf16.xpose.msra.mxu0 0
          %1109 = vmatprep.subr.bf16.mxu0 0
          %1110 = vmatpush1.bf16.xpose.msra.mxu0 0
          %1111 = vmatprep.subr.bf16.mxu0 0
          %1112 = vmatpush1.bf16.xpose.msra.mxu0 0
          %1113 = vmatprep.mubr.bf16.mxu0 0
          %1114 = vmatmul.mubr.bf16.gmra.mrb[0].mxu0 %v1055
          %v1115 = vpop.f32.mrb[0].mxu0
          %v1116 = vadd.f32 0.0, %v1115
          %v1117 = vpop.f32.mrb[0].mxu0
          %v1118 = vpop.f32.mrb[0].mxu0
          %v1119 = vadd.f32 0.0, %v1118
          %v1120 = vpop.f32.mrb[0].mxu0
          %1121 = vdwg.mxu0
          %v1122 = vld [vmem:[%s636] sm:$0xf]
          %v1123 = vld [vmem:[%s636 + $0x4] sm:$0xf]
          %v1126 = vunpack.c.l.b16 %v1122
          %v1127 = vunpack.c.l.b16 %v1123
          %v1128 = vpack.c.b16 %v1127, %v1126
          %1130 = vmatprep.subr.bf16.mxu0 0
          %1131 = vmatpush1.bf16.xpose.msra.mxu0 %v1128
          %1132 = vmatprep.subr.bf16.mxu0 0
          %1133 = vmatpush1.bf16.xpose.msra.mxu0 0
          %1134 = vmatprep.subr.bf16.mxu0 0
          %1135 = vmatpush1.bf16.xpose.msra.mxu0 0
          %1136 = vmatprep.subr.bf16.mxu0 0
          %1137 = vmatpush1.bf16.xpose.msra.mxu0 0
          %1138 = vmatprep.subr.bf16.mxu0 0
          %1139 = vmatpush1.bf16.xpose.msra.mxu0 0
          %1140 = vmatprep.subr.bf16.mxu0 0
          %1141 = vmatpush1.bf16.xpose.msra.mxu0 0
          %1142 = vmatprep.subr.bf16.mxu0 0
          %1143 = vmatpush1.bf16.xpose.msra.mxu0 0
          %1144 = vmatprep.subr.bf16.mxu0 0
          %1145 = vmatpush1.bf16.xpose.msra.mxu0 0
          %1146 = vmatprep.subr.bf16.mxu0 0
          %1147 = vmatpush1.bf16.xpose.msra.mxu0 0
          %1148 = vmatprep.subr.bf16.mxu0 0
          %1149 = vmatpush1.bf16.xpose.msra.mxu0 0
          %1150 = vmatprep.subr.bf16.mxu0 0
          %1151 = vmatpush1.bf16.xpose.msra.mxu0 0
          %1152 = vmatprep.subr.bf16.mxu0 0
          %1153 = vmatpush1.bf16.xpose.msra.mxu0 0
          %1154 = vmatprep.subr.bf16.mxu0 0
          %1155 = vmatpush1.bf16.xpose.msra.mxu0 0
          %1156 = vmatprep.subr.bf16.mxu0 0
          %1157 = vmatpush1.bf16.xpose.msra.mxu0 0
          %1158 = vmatprep.subr.bf16.mxu0 0
          %1159 = vmatpush1.bf16.xpose.msra.mxu0 0
          %1160 = vmatprep.subr.bf16.mxu0 0
          %1161 = vmatpush1.bf16.xpose.msra.mxu0 0
          %1162 = vmatprep.mubr.bf16.mxu0 0
          %1163 = vmatmul.mubr.bf16.gmra.mrb[0].mxu0 %v947
          %v1164 = vpop.f32.mrb[0].mxu0
          %v1165 = vadd.f32 0.0, %v1164
          %v1166 = vpop.f32.mrb[0].mxu0
          %v1167 = vpop.f32.mrb[0].mxu0
          %v1168 = vadd.f32 0.0, %v1167
          %v1169 = vpop.f32.mrb[0].mxu0
          %1170 = vdwg.mxu0
          %v1171 = vpack.c.bf16 %v1168, %v1165
          %v1172 = vld [vmem:[%s627] sm:$0xf]
          %v1173 = vld [vmem:[%s627 + $0x4] sm:$0xf]
          %v1174 = vld [vmem:[%s627 + $0x8] sm:$0xf]
          %v1175 = vld [vmem:[%s627 + $0xc] sm:$0xf]
          %v1176 = vld [vmem:[%s627 + $0x10] sm:$0xf]
          %v1177 = vld [vmem:[%s627 + $0x14] sm:$0xf]
          %v1178 = vld [vmem:[%s627 + $0x18] sm:$0xf]
          %v1179 = vld [vmem:[%s627 + $0x1c] sm:$0xf]
          %v1180 = vld [vmem:[%s627 + $0x20] sm:$0xf]
          %v1181 = vld [vmem:[%s627 + $0x24] sm:$0xf]
          %v1182 = vld [vmem:[%s627 + $0x28] sm:$0xf]
          %v1183 = vld [vmem:[%s627 + $0x2c] sm:$0xf]
          %v1184 = vld [vmem:[%s627 + $0x30] sm:$0xf]
          %v1185 = vld [vmem:[%s627 + $0x34] sm:$0xf]
          %v1186 = vld [vmem:[%s627 + $0x38] sm:$0xf]
          %v1187 = vld [vmem:[%s627 + $0x3c] sm:$0xf]
          %v1204 = vunpack.c.l.b16 %v1172
          %v1205 = vunpack.c.l.b16 %v1173
          %v1206 = vunpack.c.l.b16 %v1174
          %v1207 = vunpack.c.l.b16 %v1175
          %v1208 = vunpack.c.l.b16 %v1176
          %v1209 = vunpack.c.l.b16 %v1177
          %v1210 = vunpack.c.l.b16 %v1178
          %v1211 = vunpack.c.l.b16 %v1179
          %v1212 = vunpack.c.l.b16 %v1180
          %v1213 = vunpack.c.l.b16 %v1181
          %v1214 = vunpack.c.l.b16 %v1182
          %v1215 = vunpack.c.l.b16 %v1183
          %v1216 = vunpack.c.l.b16 %v1184
          %v1217 = vunpack.c.l.b16 %v1185
          %v1218 = vunpack.c.l.b16 %v1186
          %v1219 = vunpack.c.l.b16 %v1187
          %v1220 = vpack.c.b16 %v1205, %v1204
          %v1221 = vpack.c.b16 %v1207, %v1206
          %v1222 = vpack.c.b16 %v1209, %v1208
          %v1223 = vpack.c.b16 %v1211, %v1210
          %v1224 = vpack.c.b16 %v1213, %v1212
          %v1225 = vpack.c.b16 %v1215, %v1214
          %v1226 = vpack.c.b16 %v1217, %v1216
          %v1227 = vpack.c.b16 %v1219, %v1218
          %v1229 = vsel %vm1053, %v1171, 0
          %v1232 = vsel %vm1053, %v1220, 0
          %v1235 = vsel %vm1053, %v1221, 0
          %v1238 = vsel %vm1053, %v1222, 0
          %v1241 = vsel %vm1053, %v1223, 0
          %v1244 = vsel %vm1053, %v1224, 0
          %v1247 = vsel %vm1053, %v1225, 0
          %v1250 = vsel %vm1053, %v1226, 0
          %v1253 = vsel %vm1053, %v1227, 0
          %1255 = vmatprep.subr.bf16.mxu0 0
          %1256 = vmatpush1.bf16.xpose.msra.mxu0 %v1232
          %1257 = vmatprep.subr.bf16.mxu0 0
          %1258 = vmatpush1.bf16.xpose.msra.mxu0 %v1235
          %1259 = vmatprep.subr.bf16.mxu0 0
          %1260 = vmatpush1.bf16.xpose.msra.mxu0 %v1238
          %1261 = vmatprep.subr.bf16.mxu0 0
          %1262 = vmatpush1.bf16.xpose.msra.mxu0 %v1241
          %1263 = vmatprep.subr.bf16.mxu0 0
          %1264 = vmatpush1.bf16.xpose.msra.mxu0 %v1244
          %1265 = vmatprep.subr.bf16.mxu0 0
          %1266 = vmatpush1.bf16.xpose.msra.mxu0 %v1247
          %1267 = vmatprep.subr.bf16.mxu0 0
          %1268 = vmatpush1.bf16.xpose.msra.mxu0 %v1250
          %1269 = vmatprep.subr.bf16.mxu0 0
          %1270 = vmatpush1.bf16.xpose.msra.mxu0 %v1253
          %1271 = vmatprep.subr.bf16.mxu0 0
          %1272 = vmatpush1.bf16.xpose.msra.mxu0 0
          %1273 = vmatprep.subr.bf16.mxu0 0
          %1274 = vmatpush1.bf16.xpose.msra.mxu0 0
          %1275 = vmatprep.subr.bf16.mxu0 0
          %1276 = vmatpush1.bf16.xpose.msra.mxu0 0
          %1277 = vmatprep.subr.bf16.mxu0 0
          %1278 = vmatpush1.bf16.xpose.msra.mxu0 0
          %1279 = vmatprep.subr.bf16.mxu0 0
          %1280 = vmatpush1.bf16.xpose.msra.mxu0 0
          %1281 = vmatprep.subr.bf16.mxu0 0
          %1282 = vmatpush1.bf16.xpose.msra.mxu0 0
          %1283 = vmatprep.subr.bf16.mxu0 0
          %1284 = vmatpush1.bf16.xpose.msra.mxu0 0
          %1285 = vmatprep.subr.bf16.mxu0 0
          %1286 = vmatpush1.bf16.xpose.msra.mxu0 0
          %1287 = vmatprep.mubr.bf16.mxu0 0
          %1288 = vmatmul.mubr.bf16.gmra.mrb[0].mxu0 %v1229
          %v1289 = vpop.f32.mrb[0].mxu0
          %v1290 = vadd.f32 0.0, %v1289
          %v1291 = vpop.f32.mrb[0].mxu0
          %v1292 = vpop.f32.mrb[0].mxu0
          %v1293 = vadd.f32 0.0, %v1292
          %v1294 = vpop.f32.mrb[0].mxu0
          %1295 = vdwg.mxu0
          %v1296 = vld [vmem:[#allocation2] sm:$0xff]
          %v1297 = vld [vmem:[#allocation2 + $0x8] sm:$0xff]
          %v1298 = vmul.f32 %v1116, 0.5
          %v1299 = vmul.f32 %v1119, 0.5
          %v1300 = vadd.f32 %v1296, %v1298
          %v1301 = vadd.f32 %v1297, %v1299
          %v1302 = vxor.u32 %v1300, 2147483648
          %v1303 = vxor.u32 %v1301, 2147483648
          %v1304 = vmul.f32 %v1302, 1.442695
          %v1305 = vpow.pop %v1304
          %v1306 = vmul.f32 %v1303, 1.442695
          %v1307 = vpow.pop %v1306
          %v1308 = vadd.f32 %v1305, 1.0
          %v1309 = vadd.f32 %v1307, 1.0
          %v1310 = vrcp.pop %v1308
          %v1311 = vmul.f32 1.0, %v1310
          %v1312 = vrcp.pop %v1309
          %v1313 = vmul.f32 1.0, %v1312
          %v1314 = vmul.f32 %v1300, %v1311
          %v1315 = vmul.f32 %v1301, %v1313
          %v1316 = vld [vmem:[#allocation3] sm:$0xff]
          %v1317 = vld [vmem:[#allocation3 + $0x8] sm:$0xff]
          %v1318 = vmul.f32 %v1290, 0.5
          %v1319 = vmul.f32 %v1293, 0.5
          %v1320 = vadd.f32 %v1316, %v1318
          %v1321 = vadd.f32 %v1317, %v1319
          %v1322 = vmul.f32 %v1314, %v1320
          %v1323 = vmul.f32 %v1315, %v1321
          %v1324 = vld [vmem:[#allocation7] sm:$0xff]
          %v1325 = vld [vmem:[#allocation7 + $0x8] sm:$0xff]
          %v1326 = vlaneseq
          %v1327 = vand.u32 %v1326, 127
          %v1328 = vstv %s45
          %vm1329 = vcmp.eq.s32.totalorder %v1327, %v1328
          %v1330 = vsel %vm1329, %v1324, 0.0
          %v1331 = vsel %vm1329, %v1325, 0.0
          %vm1332 = vcmask 31744
          %v1333 = vsel %vm1332, %v1330, 0.0
          %1334 = vadd.xlane.f32.xlu0 %v1333
          %v1335 = vpop.xlane.xlu0 %1334
          %v1336 = vsel %vm1332, %v1331, 0.0
          %1337 = vadd.xlane.f32.xlu0 %v1336
          %v1338 = vpop.xlane.xlu0 %1337
          %v1339 = vmul.f32 %v1335, %v1322
          %v1340 = vmul.f32 %v1338, %v1323
          %v1341 = vpack.c.bf16 %v1340, %v1339
          %v1342 = vld [vmem:[#allocation15] sm:$0xf]
          %v1343 = vld [vmem:[#allocation15 + $0x4] sm:$0xf]
          %v1344 = vld [vmem:[#allocation15 + $0x8] sm:$0xf]
          %v1345 = vld [vmem:[#allocation15 + $0xc] sm:$0xf]
          %v1346 = vld [vmem:[#allocation15 + $0x10] sm:$0xf]
          %v1347 = vld [vmem:[#allocation15 + $0x14] sm:$0xf]
          %v1348 = vld [vmem:[#allocation15 + $0x18] sm:$0xf]
          %v1349 = vld [vmem:[#allocation15 + $0x1c] sm:$0xf]
          %v1350 = vld [vmem:[#allocation15 + $0x20] sm:$0xf]
          %v1351 = vld [vmem:[#allocation15 + $0x24] sm:$0xf]
          %v1352 = vld [vmem:[#allocation15 + $0x28] sm:$0xf]
          %v1353 = vld [vmem:[#allocation15 + $0x2c] sm:$0xf]
          %v1354 = vld [vmem:[#allocation15 + $0x30] sm:$0xf]
          %v1355 = vld [vmem:[#allocation15 + $0x34] sm:$0xf]
          %v1356 = vld [vmem:[#allocation15 + $0x38] sm:$0xf]
          %v1357 = vld [vmem:[#allocation15 + $0x3c] sm:$0xf]
          %v1358 = vld [vmem:[%s618] sm:$0xf]
          %v1359 = vld [vmem:[%s618 + $0x4] sm:$0xf]
          %v1362 = vunpack.c.l.b16 %v1358
          %v1363 = vunpack.c.l.b16 %v1359
          %v1364 = vpack.c.b16 %v1363, %v1362
          %1366 = vmatprep.subr.bf16.mxu0 0
          %1367 = vmatpush1.bf16.xpose.msra.mxu0 %v1364
          %1368 = vmatprep.subr.bf16.mxu0 0
          %1369 = vmatpush1.bf16.xpose.msra.mxu0 0
          %1370 = vmatprep.subr.bf16.mxu0 0
          %1371 = vmatpush1.bf16.xpose.msra.mxu0 0
          %1372 = vmatprep.subr.bf16.mxu0 0
          %1373 = vmatpush1.bf16.xpose.msra.mxu0 0
          %1374 = vmatprep.subr.bf16.mxu0 0
          %1375 = vmatpush1.bf16.xpose.msra.mxu0 0
          %1376 = vmatprep.subr.bf16.mxu0 0
          %1377 = vmatpush1.bf16.xpose.msra.mxu0 0
          %1378 = vmatprep.subr.bf16.mxu0 0
          %1379 = vmatpush1.bf16.xpose.msra.mxu0 0
          %1380 = vmatprep.subr.bf16.mxu0 0
          %1381 = vmatpush1.bf16.xpose.msra.mxu0 0
          %1382 = vmatprep.subr.bf16.mxu0 0
          %1383 = vmatpush1.bf16.xpose.msra.mxu0 0
          %1384 = vmatprep.subr.bf16.mxu0 0
          %1385 = vmatpush1.bf16.xpose.msra.mxu0 0
          %1386 = vmatprep.subr.bf16.mxu0 0
          %1387 = vmatpush1.bf16.xpose.msra.mxu0 0
          %1388 = vmatprep.subr.bf16.mxu0 0
          %1389 = vmatpush1.bf16.xpose.msra.mxu0 0
          %1390 = vmatprep.subr.bf16.mxu0 0
          %1391 = vmatpush1.bf16.xpose.msra.mxu0 0
          %1392 = vmatprep.subr.bf16.mxu0 0
          %1393 = vmatpush1.bf16.xpose.msra.mxu0 0
          %1394 = vmatprep.subr.bf16.mxu0 0
          %1395 = vmatpush1.bf16.xpose.msra.mxu0 0
          %1396 = vmatprep.subr.bf16.mxu0 0
          %1397 = vmatpush1.bf16.xpose.msra.mxu0 0
          %1398 = vmatprep.mubr.bf16.mxu0 0
          %1399 = vmatmul.mubr.bf16.gmra.mrb[0].mxu0 %v1341
          %v1400 = vpop.f32.mrb[0].mxu0
          %v1401 = vadd.f32 0.0, %v1400
          %v1402 = vpop.f32.mrb[0].mxu0
          %v1403 = vpop.f32.mrb[0].mxu0
          %v1404 = vadd.f32 0.0, %v1403
          %v1405 = vpop.f32.mrb[0].mxu0
          %1406 = vdwg.mxu0
          %v1407 = vpack.c.bf16 %v1404, %v1401
          %v1408 = vld [vmem:[%s609] sm:$0xf]
          %v1409 = vld [vmem:[%s609 + $0x4] sm:$0xf]
          %v1410 = vld [vmem:[%s609 + $0x8] sm:$0xf]
          %v1411 = vld [vmem:[%s609 + $0xc] sm:$0xf]
          %v1412 = vld [vmem:[%s609 + $0x10] sm:$0xf]
          %v1413 = vld [vmem:[%s609 + $0x14] sm:$0xf]
          %v1414 = vld [vmem:[%s609 + $0x18] sm:$0xf]
          %v1415 = vld [vmem:[%s609 + $0x1c] sm:$0xf]
          %v1416 = vld [vmem:[%s609 + $0x20] sm:$0xf]
          %v1417 = vld [vmem:[%s609 + $0x24] sm:$0xf]
          %v1418 = vld [vmem:[%s609 + $0x28] sm:$0xf]
          %v1419 = vld [vmem:[%s609 + $0x2c] sm:$0xf]
          %v1420 = vld [vmem:[%s609 + $0x30] sm:$0xf]
          %v1421 = vld [vmem:[%s609 + $0x34] sm:$0xf]
          %v1422 = vld [vmem:[%s609 + $0x38] sm:$0xf]
          %v1423 = vld [vmem:[%s609 + $0x3c] sm:$0xf]
          %v1440 = vunpack.c.l.b16 %v1408
          %v1441 = vunpack.c.l.b16 %v1409
          %v1442 = vunpack.c.l.b16 %v1410
          %v1443 = vunpack.c.l.b16 %v1411
          %v1444 = vunpack.c.l.b16 %v1412
          %v1445 = vunpack.c.l.b16 %v1413
          %v1446 = vunpack.c.l.b16 %v1414
          %v1447 = vunpack.c.l.b16 %v1415
          %v1448 = vunpack.c.l.b16 %v1416
          %v1449 = vunpack.c.l.b16 %v1417
          %v1450 = vunpack.c.l.b16 %v1418
          %v1451 = vunpack.c.l.b16 %v1419
          %v1452 = vunpack.c.l.b16 %v1420
          %v1453 = vunpack.c.l.b16 %v1421
          %v1454 = vunpack.c.l.b16 %v1422
          %v1455 = vunpack.c.l.b16 %v1423
          %v1456 = vpack.c.b16 %v1441, %v1440
          %v1457 = vpack.c.b16 %v1443, %v1442
          %v1458 = vpack.c.b16 %v1445, %v1444
          %v1459 = vpack.c.b16 %v1447, %v1446
          %v1460 = vpack.c.b16 %v1449, %v1448
          %v1461 = vpack.c.b16 %v1451, %v1450
          %v1462 = vpack.c.b16 %v1453, %v1452
          %v1463 = vpack.c.b16 %v1455, %v1454
          %v1465 = vsel %vm1053, %v1407, 0
          %v1468 = vsel %vm1053, %v1456, 0
          %v1471 = vsel %vm1053, %v1457, 0
          %v1474 = vsel %vm1053, %v1458, 0
          %v1477 = vsel %vm1053, %v1459, 0
          %v1480 = vsel %vm1053, %v1460, 0
          %v1483 = vsel %vm1053, %v1461, 0
          %v1486 = vsel %vm1053, %v1462, 0
          %v1489 = vsel %vm1053, %v1463, 0
          %1491 = vmatprep.subr.bf16.mxu0 0
          %1492 = vmatpush1.bf16.xpose.msra.mxu0 %v1468
          %1493 = vmatprep.subr.bf16.mxu0 0
          %1494 = vmatpush1.bf16.xpose.msra.mxu0 %v1471
          %1495 = vmatprep.subr.bf16.mxu0 0
          %1496 = vmatpush1.bf16.xpose.msra.mxu0 %v1474
          %1497 = vmatprep.subr.bf16.mxu0 0
          %1498 = vmatpush1.bf16.xpose.msra.mxu0 %v1477
          %1499 = vmatprep.subr.bf16.mxu0 0
          %1500 = vmatpush1.bf16.xpose.msra.mxu0 %v1480
          %1501 = vmatprep.subr.bf16.mxu0 0
          %1502 = vmatpush1.bf16.xpose.msra.mxu0 %v1483
          %1503 = vmatprep.subr.bf16.mxu0 0
          %1504 = vmatpush1.bf16.xpose.msra.mxu0 %v1486
          %1505 = vmatprep.subr.bf16.mxu0 0
          %1506 = vmatpush1.bf16.xpose.msra.mxu0 %v1489
          %1507 = vmatprep.subr.bf16.mxu0 0
          %1508 = vmatpush1.bf16.xpose.msra.mxu0 0
          %1509 = vmatprep.subr.bf16.mxu0 0
          %1510 = vmatpush1.bf16.xpose.msra.mxu0 0
          %1511 = vmatprep.subr.bf16.mxu0 0
          %1512 = vmatpush1.bf16.xpose.msra.mxu0 0
          %1513 = vmatprep.subr.bf16.mxu0 0
          %1514 = vmatpush1.bf16.xpose.msra.mxu0 0
          %1515 = vmatprep.subr.bf16.mxu0 0
          %1516 = vmatpush1.bf16.xpose.msra.mxu0 0
          %1517 = vmatprep.subr.bf16.mxu0 0
          %1518 = vmatpush1.bf16.xpose.msra.mxu0 0
          %1519 = vmatprep.subr.bf16.mxu0 0
          %1520 = vmatpush1.bf16.xpose.msra.mxu0 0
          %1521 = vmatprep.subr.bf16.mxu0 0
          %1522 = vmatpush1.bf16.xpose.msra.mxu0 0
          %1523 = vmatprep.mubr.bf16.mxu0 0
          %1524 = vmatmul.mubr.bf16.gmra.mrb[0].mxu0 %v1465
          %v1525 = vpop.f32.mrb[0].mxu0
          %v1526 = vadd.f32 0.0, %v1525
          %v1527 = vpop.f32.mrb[0].mxu0
          %v1528 = vpop.f32.mrb[0].mxu0
          %v1529 = vadd.f32 0.0, %v1528
          %v1530 = vpop.f32.mrb[0].mxu0
          %1531 = vdwg.mxu0
          %v1532 = vld [vmem:[#allocation4] sm:$0xff]
          %v1533 = vld [vmem:[#allocation4 + $0x8] sm:$0xff]
          %v1534 = vmul.f32 %v1526, 0.5
          %v1535 = vmul.f32 %v1529, 0.5
          %v1552 = vunpack.c.l.b16 %v1342
          %v1553 = vunpack.c.l.b16 %v1343
          %v1554 = vunpack.c.l.b16 %v1344
          %v1555 = vunpack.c.l.b16 %v1345
          %v1556 = vunpack.c.l.b16 %v1346
          %v1557 = vunpack.c.l.b16 %v1347
          %v1558 = vunpack.c.l.b16 %v1348
          %v1559 = vunpack.c.l.b16 %v1349
          %v1560 = vunpack.c.l.b16 %v1350
          %v1561 = vunpack.c.l.b16 %v1351
          %v1562 = vunpack.c.l.b16 %v1352
          %v1563 = vunpack.c.l.b16 %v1353
          %v1564 = vunpack.c.l.b16 %v1354
          %v1565 = vunpack.c.l.b16 %v1355
          %v1566 = vunpack.c.l.b16 %v1356
          %v1567 = vunpack.c.l.b16 %v1357
          %v1568 = vpack.c.b16 %v1553, %v1552
          %v1569 = vpack.c.b16 %v1555, %v1554
          %v1570 = vpack.c.b16 %v1557, %v1556
          %v1571 = vpack.c.b16 %v1559, %v1558
          %v1572 = vpack.c.b16 %v1561, %v1560
          %v1573 = vpack.c.b16 %v1563, %v1562
          %v1574 = vpack.c.b16 %v1565, %v1564
          %v1575 = vpack.c.b16 %v1567, %v1566
          %1584 = vmatprep.subr.bf16.mxu0 0
          %1585 = vmatpush1.bf16.xpose.msra.mxu0 %v1568
          %1586 = vmatprep.subr.bf16.mxu0 0
          %1587 = vmatpush1.bf16.xpose.msra.mxu0 %v1569
          %1588 = vmatprep.subr.bf16.mxu0 0
          %1589 = vmatpush1.bf16.xpose.msra.mxu0 %v1570
          %1590 = vmatprep.subr.bf16.mxu0 0
          %1591 = vmatpush1.bf16.xpose.msra.mxu0 %v1571
          %1592 = vmatprep.subr.bf16.mxu0 0
          %1593 = vmatpush1.bf16.xpose.msra.mxu0 %v1572
          %1594 = vmatprep.subr.bf16.mxu0 0
          %1595 = vmatpush1.bf16.xpose.msra.mxu0 %v1573
          %1596 = vmatprep.subr.bf16.mxu0 0
          %1597 = vmatpush1.bf16.xpose.msra.mxu0 %v1574
          %1598 = vmatprep.subr.bf16.mxu0 0
          %1599 = vmatpush1.bf16.xpose.msra.mxu0 %v1575
          %1600 = vmatprep.subr.bf16.mxu0 0
          %1601 = vmatpush1.bf16.xpose.msra.mxu0 0
          %1602 = vmatprep.subr.bf16.mxu0 0
          %1603 = vmatpush1.bf16.xpose.msra.mxu0 0
          %1604 = vmatprep.subr.bf16.mxu0 0
          %1605 = vmatpush1.bf16.xpose.msra.mxu0 0
          %1606 = vmatprep.subr.bf16.mxu0 0
          %1607 = vmatpush1.bf16.xpose.msra.mxu0 0
          %1608 = vmatprep.subr.bf16.mxu0 0
          %1609 = vmatpush1.bf16.xpose.msra.mxu0 0
          %1610 = vmatprep.subr.bf16.mxu0 0
          %1611 = vmatpush1.bf16.xpose.msra.mxu0 0
          %1612 = vmatprep.subr.bf16.mxu0 0
          %1613 = vmatpush1.bf16.xpose.msra.mxu0 0
          %1614 = vmatprep.subr.bf16.mxu0 0
          %1615 = vmatpush1.bf16.xpose.msra.mxu0 0
          %1616 = vmatprep.mubr.bf16.mxu0 0
          %1617 = vmatmul.mubr.bf16.gmra.mrb[0].mxu0 %v1341
          %v1618 = vpop.f32.mrb[0].mxu0
          %v1619 = vadd.f32 %v1534, %v1618
          %v1620 = vpop.f32.mrb[0].mxu0
          %v1621 = vpop.f32.mrb[0].mxu0
          %v1622 = vadd.f32 %v1535, %v1621
          %v1623 = vpop.f32.mrb[0].mxu0
          %1624 = vdwg.mxu0
          %v1625 = vadd.f32 %v1532, %v1619
          %v1626 = vadd.f32 %v1533, %v1622
          %1627 = vst [vmem:[#allocation4] sm:$0xff] %v1625
          %1628 = vst [vmem:[#allocation4 + $0x8] sm:$0xff] %v1626
        $region116: #{tpu_custom_call.1} parent=63 // pred_fallthru
          _
        %p1629 = scmp.eq.s32.totalorder %s45, 3
        // Predicated region
        $region117: #{tpu_custom_call.1} parent=63 // pred_check
          %p1630 = pneg %p1629
        $region118: #{tpu_custom_call.1} parent=63 // pred_check_branch
          %1632 = sbr.rel (%p1630) target = $region120
        $region119: #{tpu_custom_call.1} parent=63 // pred_region
          %v1633 = vld [vmem:[#allocation4] sm:$0xff]
          %v1634 = vld [vmem:[#allocation4 + $0x8] sm:$0xff]
          %1635 = vst [vmem:[#allocation25] sm:$0xff] %v1633
          %1636 = vst [vmem:[#allocation25 + $0x8] sm:$0xff] %v1634
        $region120: #{tpu_custom_call.1} parent=63 // pred_fallthru
          _
        // Predicated region
        $region121: #{tpu_custom_call.1} parent=63 // pred_check
          %p1637 = pneg %p341
        $region122: #{tpu_custom_call.1} parent=63 // pred_check_branch
          %1639 = sbr.rel (%p1637) target = $region124
        $region123: #{tpu_custom_call.1} parent=63 // pred_region
          %s1640 = smul.u32 2, %s44
          %s1642 = ssub.s32 256, 256
          %1643 = vsyncadd [#allocation9], %s1642
          %s1644 = smul.addr %s1640, 128
          %s1645 = scalar_lea.hbm %s12, %s1644
          %s1646 = sshll.u32 [#allocation25], 4
          %s1647 = int_to_ptr.vmem [resolvable:$true] %s1646
          %1652 = dma.vmem_to_hbm [thread:$0]  %s1647, 256, %s1645, [#allocation9], 128, 128, 8
        $region124: #{tpu_custom_call.1} parent=63 // pred_fallthru
          _
        // Predicated region
        $region125: #{tpu_custom_call.1} parent=63 // pred_check
          %p1653 = pneg %p341
        $region126: #{tpu_custom_call.1} parent=63 // pred_check_branch
          %1655 = sbr.rel (%p1653) target = $region128
        $region127: #{tpu_custom_call.1} parent=63 // pred_region
          %1656 = dma.done [#allocation9], 256
        $region128: #{tpu_custom_call.1} parent=63 // pred_fallthru
          _
      $region64: #{tpu_custom_call.1} parent=5 // pred_fallthru
        _
      %p1657 = scmp.le.s32.totalorder 2, %s35
      // Predicated region
      $region129: #{tpu_custom_call.1} parent=5 // pred_check
        %p1658 = pneg %p1657
      $region130: #{tpu_custom_call.1} parent=5 // pred_check_branch
        %1660 = sbr.rel (%p1658) target = $region132
      $region131: #{tpu_custom_call.1} parent=5 // pred_region
        %s1661 = ssub.s32 %s35, 2
      $region132: #{tpu_custom_call.1} parent=5 // pred_fallthru
        _
    $region6: #{tpu_custom_call.1} parent=1 // loop_footer
      %s39 = sadd.s32 1, %s35
    $region7: #{tpu_custom_call.1} parent=1 // loop_footer_branch
      %34 = sbr.rel target = $region3
    $region8: #{tpu_custom_call.1} parent=1 // loop_exit
      _
    %1662 = vsyncpa [#allocation8], 1
    %s1663 = scalar_lea.sflag [#allocation8], 1
    %1664 = vsyncpa %s1663, 1
    %1665 = vsyncpa [#allocation11], 1
    %1666 = vsyncpa [#allocation14], 1
    %1667 = vsyncpa [#allocation17], 1
    %s1668 = scalar_lea.sflag [#allocation17], 1
    %1669 = vsyncpa %s1668, 1
    %1670 = vsyncpa [#allocation20], 1
    %s1671 = scalar_lea.sflag [#allocation20], 1
    %1672 = vsyncpa %s1671, 1
    %1673 = vsyncpa [#allocation23], 1
    %s1674 = scalar_lea.sflag [#allocation23], 1
    %1675 = vsyncpa %s1674, 1
    %1676 = vsyncpa [#allocation9], 1
    %s1677 = scalar_lea.sflag [#allocation9], 1
    %1678 = vsyncpa %s1677, 1

</llo_original>
